<compile_context>
chip_gen: v7x
topology: tpu7x:2x2x1
jax: 0.10.0
libtpu: 0.0.40
codegen_flags: <defaults>
</compile_context>

<pallas_src>
import math

import numpy as np
import jax
import jax.numpy as jnp
from jax.experimental import pallas as pl
from jax.experimental.pallas import tpu as pltpu


# ----------------------------- model structure ------------------------------

def build_conv_configs(SoW_len, output_size, embedding_dim=8, hidden_channel_dim=32):
    """Replicates hnet_deconv.__init__ layer construction.

    Returns list of (C_in, C_out, K, stride, padding, relu) tuples and the
    per-layer (L_in, L_out) length schedule starting from L = embedding_dim.
    """
    assert SoW_len <= embedding_dim
    assert embedding_dim < output_size

    cfgs = []
    n_up_ch = int(math.floor(math.log(hidden_channel_dim, 2)))
    out_ch = 1
    for _ in range(n_up_ch):
        in_ch = out_ch
        out_ch = in_ch * 2
        cfgs.append((in_ch, out_ch, 3, 1, 1, True))
    cfgs.append((out_ch, hidden_channel_dim, 3, 1, 1, True))

    out_ch = hidden_channel_dim
    n_up_len = int(math.floor(math.log(output_size / embedding_dim, 2)))
    for _ in range(n_up_len):
        in_ch = out_ch
        out_ch = math.ceil(in_ch / 2)
        cfgs.append((in_ch, out_ch, 4, 2, 1, True))

    input_size_final = embedding_dim * 2 ** n_up_len
    k_final = output_size - input_size_final + 1
    cfgs.append((out_ch, 1, k_final, 1, 0, False))  # no ReLU after final deconv

    lengths = []
    L = embedding_dim
    for (_cin, _cout, K, s, p, _relu) in cfgs:
        L_out = (L - 1) * s - 2 * p + K
        lengths.append((L, L_out))
        L = L_out
    assert L == output_size
    return cfgs, lengths


def init_params(key, SoW_len, embedding_dim, cfgs):
    """Deterministic synthetic init (uniform +-1/sqrt(fan_in))."""
    params = {}
    key, k1, k2 = jax.random.split(key, 3)
    bound = 1.0 / math.sqrt(SoW_len)
    # stored already transposed for (B, SoW_len) @ (SoW_len, emb)
    params["lin_wT"] = jax.random.uniform(k1, (SoW_len, embedding_dim), jnp.float32,
                                          -bound, bound)
    params["lin_b"] = jax.random.uniform(k2, (1, embedding_dim), jnp.float32,
                                         -bound, bound)
    conv_w, conv_b = [], []
    for (cin, cout, K, s, p, relu) in cfgs:
        key, kw, kb = jax.random.split(key, 3)
        bound = 1.0 / math.sqrt(cin * K)
        # torch weight layout is (C_in, C_out, K); store tap-major transposed:
        # w_t[k] = weight[:, :, k].T  -> shape (K, C_out, C_in)
        w_t = jax.random.uniform(kw, (K, cout, cin), jnp.float32, -bound, bound)
        b = jax.random.uniform(kb, (cout, 1), jnp.float32, -bound, bound)
        conv_w.append(w_t)
        conv_b.append(b)
    params["conv_w"] = conv_w
    params["conv_b"] = conv_b
    return params


# ------------------------ host-side weight folding ---------------------------

def fold_layers(params, cfgs, lengths):
    """Fold every deconv layer (weights x shift/upsample structure) into a dense
    matrix acting on the flat row vector x_flat[c*L + t]:

        M[c*L_in + i, o*L_out + t] = weight[c, o, k]   with  k = t - s*i + p

    Each (i, t) pair is hit by at most one tap, so the fold is an exact
    selection of weights.  The relu-free linear embedding is composed into the
    first deconv layer (exact linear composition, done in float64).
    Returns a list of (M, b_flat, relu).
    """
    conv_mats = []
    for (w_t, b), (cin, cout, K, s, p, relu), (L_in, L_out) in zip(
            zip(params["conv_w"], params["conv_b"]), cfgs, lengths):
        w_t = np.asarray(w_t, np.float64)   # (K, cout, cin)
        b = np.asarray(b, np.float64)       # (cout, 1)
        T = np.zeros((K, L_in, L_out), np.float64)
        for k in range(K):
            for i in range(L_in):
                t = s * i + k - p
                if 0 <= t < L_out:
                    T[k, i, t] = 1.0
        # M4[c, i, o, t] = sum_k w_t[k, o, c] * T[k, i, t]   (<=1 nonzero term)
        M4 = np.einsum('koc,kit->ciot', w_t, T)
        M = M4.reshape(cin * L_in, cout * L_out)
        b_flat = np.broadcast_to(b, (cout, L_out)).reshape(-1)
        conv_mats.append((M, b_flat, relu))

    # compose the relu-free linear embedding into the first deconv layer
    lin_wT = np.asarray(params["lin_wT"], np.float64)            # (SoW_len, emb)
    lin_b = np.asarray(params["lin_b"], np.float64).reshape(-1)  # (emb,)
    M1, b1, r1 = conv_mats[0]
    M01 = lin_wT @ M1
    b01 = lin_b @ M1 + b1
    return [(M01, b01, r1)] + conv_mats[1:]


# ------------------------------ slab packing ---------------------------------

_ROW_ALIGN = 16    # bf16 packs 2 rows / sublane -> keep every per-layer row offset 16-aligned
_COL_ALIGN = 128   # lane width


def pack_slabs(layers):
    """Row-pack the folded layers into one 2-D weight slab + one bias slab.

    Layer l occupies rows [off_l, off_l + rows_l) of the slab and cols
    [0, cols_l).  rows_l equals the previous layer's padded column width so the
    activation never has to be re-sliced between layers; all padding is zero so
    pad lanes stay exactly 0 through the whole chain (relu(0) == 0).
    """
    n = len(layers)
    cols_pad = [max(_COL_ALIGN, -(-M.shape[1] // _COL_ALIGN) * _COL_ALIGN)
                for (M, _b, _r) in layers]
    rows_pad = []
    for li, (M, _b, _r) in enumerate(layers):
        if li == 0:
            rp = max(_ROW_ALIGN, -(-M.shape[0] // _ROW_ALIGN) * _ROW_ALIGN)
        else:
            rp = cols_pad[li - 1]
        assert rp >= M.shape[0]
        rows_pad.append(rp)

    c_max = max(cols_pad)
    total_rows = sum(rows_pad)
    m_slab = np.zeros((total_rows, c_max), np.float32)
    b_slab = np.zeros((8 * n, c_max), np.float32)     # one sublane-aligned row per layer
    geom = []
    off = 0
    for li, (M, b_flat, relu) in enumerate(layers):
        r, c = M.shape
        m_slab[off:off + r, :c] = M.astype(np.float32)
        b_slab[8 * li, :c] = b_flat.astype(np.float32)
        geom.append((off, rows_pad[li], cols_pad[li], bool(relu)))
        off += rows_pad[li]
    return m_slab, b_slab, tuple(geom)


# ------------------------------ Pallas kernel --------------------------------

def make_hnet_kernel(layer_geom):
    """Whole forward pass for one (TB, rows0) tile of SoW rows:
    log10 -> chain of (TB, r_l) @ (r_l, c_l) bf16 MXU matmuls (+ bias, + ReLU)."""

    def kernel(sow_ref, m_ref, b_ref, out_ref):
        x = jnp.log10(sow_ref[...])                            # (TB, rows0) f32; pad lanes -> 0
        for li, (off, rows, cols, relu) in enumerate(layer_geom):  # static unroll (~9 layers)
            w = m_ref[off:off + rows, 0:cols]                  # bf16 block of layer l
            y = jnp.dot(x.astype(jnp.bfloat16), w,
                        preferred_element_type=jnp.float32)    # f32 accumulate on the MXU
            y = y + b_ref[8 * li:8 * li + 1, 0:cols]           # f32 bias (VPU)
            if relu:
                y = jnp.maximum(y, 0.0)
            x = y                                              # stays f32 between layers
        out_ref[...] = x                                       # (TB, cols_last)

    return kernel


def hnet_deconv_forward(SoW, m_slab, b_slab, geom, output_size, *, batch_tile=8):
    """Forward pass.  SoW: (SoW_len,) (module semantics) or (B, SoW_len) batch."""
    assert batch_tile % 8 == 0
    single = (jnp.ndim(SoW) == 1)
    sow2 = jnp.atleast_2d(jnp.asarray(SoW, jnp.float32))
    B, sow_len = sow2.shape
    rows0 = geom[0][1]
    cols_out = geom[-1][2]
    assert sow_len <= rows0

    TB = batch_tile
    B_pad = int(pl.cdiv(B, TB)) * TB
    # pad value 1.0 -> log10(pad) == 0 inside the kernel (load-bearing: avoids NaN)
    sow_pad = jnp.ones((B_pad, rows0), jnp.float32).at[:B, :sow_len].set(sow2)

    total_rows, c_max = m_slab.shape
    kernel = make_hnet_kernel(geom)
    out = pl.pallas_call(
        kernel,
        out_shape=jax.ShapeDtypeStruct((B_pad, cols_out), jnp.float32),
        grid_spec=pltpu.PrefetchScalarGridSpec(
            num_scalar_prefetch=0,
            grid=(B_pad // TB,),
            in_specs=[
                pl.BlockSpec((TB, rows0), lambda i: (i, 0)),           # batch tile
                pl.BlockSpec((total_rows, c_max), lambda i: (0, 0)),   # weight slab: DMA'd once
                pl.BlockSpec(b_slab.shape, lambda i: (0, 0)),          # bias slab:   DMA'd once
            ],
            out_specs=pl.BlockSpec((TB, cols_out), lambda i: (i, 0)),
        ),
        compiler_params=pltpu.CompilerParams(
            dimension_semantics=("parallel",),     # v7x: shard batch tiles across both TCs
            vmem_limit_bytes=32 * 1024 * 1024,
        ),
    )(sow_pad, m_slab, b_slab)

    out = out[:B, :output_size]
    return out[0] if single else out


# --------------------------- numpy references (check) -------------------------

def _round_bf16(a):
    """Round-to-nearest-even f32 -> bf16 -> f32 (matches the in-kernel cast)."""
    return np.asarray(jnp.asarray(a, jnp.float32).astype(jnp.bfloat16).astype(jnp.float32))


def ref_forward_folded(sow_batch, m_q32, b_slab, geom, output_size):
    """NumPy replay of exactly what the kernel computes (same bf16-rounded slab,
    same per-layer activation rounding, f32 accumulate)."""
    rows0 = geom[0][1]
    B, sow_len = sow_batch.shape
    x = np.zeros((B, rows0), np.float32)
    x[:, :sow_len] = np.log10(sow_batch.astype(np.float32))
    for li, (off, rows, cols, relu) in enumerate(geom):
        w = m_q32[off:off + rows, :cols]
        y = _round_bf16(x) @ w + b_slab[8 * li, :cols][None, :]
        if relu:
            y = np.maximum(y, 0.0)
        x = y
    return x[:, :output_size]


def ref_forward_np(sow, params, cfgs):
    """Float64 reference using the original tap-by-tap transposed-conv formula."""
    x = np.log10(np.asarray(sow, np.float64)).reshape(1, -1)
    x = x @ np.asarray(params["lin_wT"], np.float64) + np.asarray(params["lin_b"], np.float64)
    for (w_t, b), (cin, cout, K, s, p, relu) in zip(
            zip(params["conv_w"], params["conv_b"]), cfgs):
        w_t = np.asarray(w_t, np.float64)
        b = np.asarray(b, np.float64)
        L_in = x.shape[1]
        L_out = (L_in - 1) * s - 2 * p + K
        y = np.zeros((cout, L_out), np.float64)
        for k in range(K):
            for i in range(L_in):
                t = s * i + k - p
                if 0 <= t < L_out:
                    y[:, t] += w_t[k] @ x[:, i]
        y = y + b
        if relu:
            y = np.maximum(y, 0.0)
        x = y
    return np.squeeze(x)


# ----------------------------------- main ------------------------------------

if __name__ == "__main__":
    # small config consistent with the module's constraints
    SoW_len = 4            # SoW_len <= embedding_dim
    embedding_dim = 8
    hidden_channel_dim = 32
    output_size = 32       # output_size > embedding_dim
    batch = 16             # SoW vectors pushed through the batched kernel
    batch_tile = 8         # rows per grid step (use 128 on v5e / 256 on v6e,v7x for throughput)

    cfgs, lengths = build_conv_configs(SoW_len, output_size,
                                       embedding_dim, hidden_channel_dim)
    params = init_params(jax.random.PRNGKey(0), SoW_len, embedding_dim, cfgs)

    # host-side exact fold (lin folded into conv0) + row-packed slabs
    layers = fold_layers(params, cfgs, lengths)
    m_np, b_np, geom = pack_slabs(layers)
    m_slab = jnp.asarray(m_np, jnp.bfloat16)          # bf16 weight slab (half the DMA bytes)
    b_slab = jnp.asarray(b_np, jnp.float32)
    m_q32 = np.asarray(m_slab.astype(jnp.float32))    # the exact weight values the kernel sees

    # positive SoW so log10 is well defined
    key_in = jax.random.PRNGKey(0)
    sow_batch = jax.random.uniform(key_in, (batch, SoW_len), jnp.float32, 0.5, 5.0)

    out_b = hnet_deconv_forward(sow_batch, m_slab, b_slab, geom, output_size,
                                batch_tile=batch_tile)
    out_b = jax.block_until_ready(out_b)
    assert out_b.shape == (batch, output_size), out_b.shape
    out_b_np = np.asarray(out_b)
    sow_np = np.asarray(sow_batch)

    # tight check: kernel vs a NumPy replay of the identical folded / bf16 pipeline
    ref_q = ref_forward_folded(sow_np, m_q32, b_np, geom, output_size)
    np.testing.assert_allclose(out_b_np, ref_q, rtol=1e-2, atol=1e-3)

    # semantic check: original tap-by-tap module math in float64 (looser tol: bf16 weights)
    ref64 = np.stack([ref_forward_np(sow_np[i], params, cfgs) for i in range(batch)])
    np.testing.assert_allclose(out_b_np, ref64, rtol=5e-2, atol=1e-2)

    # module semantics: a single SoW vector -> (output_size,) just like torch.squeeze(y)
    out_1 = hnet_deconv_forward(sow_np[0], m_slab, b_slab, geom, output_size,
                                batch_tile=batch_tile)
    out_1 = jax.block_until_ready(out_1)
    assert out_1.shape == (output_size,), out_1.shape
    np.testing.assert_allclose(np.asarray(out_1), out_b_np[0], rtol=1e-5, atol=1e-6)

    print("KERNEL_OK")
</pallas_src>

<mosaic_0001>
module attributes {stable_mosaic.version = 11 : i64} {
  func.func @kernel(%arg0: i32, %arg1: memref<8x16xf32, #tpu.memory_space<vmem>>, %arg2: memref<1552x256xbf16, #tpu.memory_space<vmem>>, %arg3: memref<72x256xf32, #tpu.memory_space<vmem>>, %arg4: memref<8x128xf32, #tpu.memory_space<vmem>>) attributes {dimension_semantics = [#tpu.dimension_semantics<parallel>], iteration_bounds = array<i64: 2>, scalar_prefetch = 0 : i64, scratch_operands = 0 : i64, tpu.core_type = #tpu.core_type<tc>, window_params = [{transform_indices = @transform_0, window_bounds = array<i64: 8, 16>}, {pipeline_mode = #tpu.pipeline_mode<synchronous>, transform_indices = @transform_1, window_bounds = array<i64: 1552, 256>}, {pipeline_mode = #tpu.pipeline_mode<synchronous>, transform_indices = @transform_2, window_bounds = array<i64: 72, 256>}, {transform_indices = @transform_3, window_bounds = array<i64: 8, 128>}]} {
    %c0 = arith.constant 0 : index
    %c0_0 = arith.constant 0 : index
    %0 = vector.load %arg1[%c0, %c0_0] : memref<8x16xf32, #tpu.memory_space<vmem>>, vector<8x16xf32>
    %1 = math.log %0 : vector<8x16xf32>
    %cst = arith.constant 0.434294492 : f32
    %2 = vector.broadcast %cst : f32 to vector<8x16xf32>
    %3 = arith.mulf %1, %2 : vector<8x16xf32>
    %c0_1 = arith.constant 0 : index
    %c0_2 = arith.constant 0 : index
    %4 = vector.load %arg2[%c0_1, %c0_2] : memref<1552x256xbf16, #tpu.memory_space<vmem>>, vector<16x128xbf16>
    %5 = arith.truncf %3 : vector<8x16xf32> to vector<8x16xbf16>
    %cst_3 = arith.constant dense<0.000000e+00> : vector<8x128xf32>
    %6 = tpu.matmul %5, %4, %cst_3 {dimension_numbers = #tpu.dot_dimension_numbers<[1], [0], [0], [1], [0, 0, 1, 1], [], []>} : vector<8x16xbf16>, vector<16x128xbf16>, vector<8x128xf32> -> vector<8x128xf32>
    %c0_4 = arith.constant 0 : index
    %c0_5 = arith.constant 0 : index
    %7 = vector.load %arg3[%c0_4, %c0_5] : memref<72x256xf32, #tpu.memory_space<vmem>>, vector<1x128xf32>
    %8 = vector.broadcast %7 : vector<1x128xf32> to vector<8x128xf32>
    %9 = arith.addf %6, %8 : vector<8x128xf32>
    %cst_6 = arith.constant 0.000000e+00 : f32
    %10 = vector.broadcast %cst_6 : f32 to vector<8x128xf32>
    %11 = arith.maximumf %9, %10 : vector<8x128xf32>
    %c16 = arith.constant 16 : index
    %c0_7 = arith.constant 0 : index
    %12 = vector.load %arg2[%c16, %c0_7] : memref<1552x256xbf16, #tpu.memory_space<vmem>>, vector<128x128xbf16>
    %13 = arith.truncf %11 : vector<8x128xf32> to vector<8x128xbf16>
    %cst_8 = arith.constant dense<0.000000e+00> : vector<8x128xf32>
    %14 = tpu.matmul %13, %12, %cst_8 {dimension_numbers = #tpu.dot_dimension_numbers<[1], [0], [0], [1], [0, 0, 1, 1], [], []>} : vector<8x128xbf16>, vector<128x128xbf16>, vector<8x128xf32> -> vector<8x128xf32>
    %c8 = arith.constant 8 : index
    %c0_9 = arith.constant 0 : index
    %15 = vector.load %arg3[%c8, %c0_9] : memref<72x256xf32, #tpu.memory_space<vmem>>, vector<1x128xf32>
    %16 = vector.broadcast %15 : vector<1x128xf32> to vector<8x128xf32>
    %17 = arith.addf %14, %16 : vector<8x128xf32>
    %cst_10 = arith.constant 0.000000e+00 : f32
    %18 = vector.broadcast %cst_10 : f32 to vector<8x128xf32>
    %19 = arith.maximumf %17, %18 : vector<8x128xf32>
    %c144 = arith.constant 144 : index
    %c0_11 = arith.constant 0 : index
    %20 = vector.load %arg2[%c144, %c0_11] : memref<1552x256xbf16, #tpu.memory_space<vmem>>, vector<128x128xbf16>
    %21 = arith.truncf %19 : vector<8x128xf32> to vector<8x128xbf16>
    %cst_12 = arith.constant dense<0.000000e+00> : vector<8x128xf32>
    %22 = tpu.matmul %21, %20, %cst_12 {dimension_numbers = #tpu.dot_dimension_numbers<[1], [0], [0], [1], [0, 0, 1, 1], [], []>} : vector<8x128xbf16>, vector<128x128xbf16>, vector<8x128xf32> -> vector<8x128xf32>
    %c16_13 = arith.constant 16 : index
    %c0_14 = arith.constant 0 : index
    %23 = vector.load %arg3[%c16_13, %c0_14] : memref<72x256xf32, #tpu.memory_space<vmem>>, vector<1x128xf32>
    %24 = vector.broadcast %23 : vector<1x128xf32> to vector<8x128xf32>
    %25 = arith.addf %22, %24 : vector<8x128xf32>
    %cst_15 = arith.constant 0.000000e+00 : f32
    %26 = vector.broadcast %cst_15 : f32 to vector<8x128xf32>
    %27 = arith.maximumf %25, %26 : vector<8x128xf32>
    %c272 = arith.constant 272 : index
    %c0_16 = arith.constant 0 : index
    %28 = vector.load %arg2[%c272, %c0_16] : memref<1552x256xbf16, #tpu.memory_space<vmem>>, vector<128x128xbf16>
    %29 = arith.truncf %27 : vector<8x128xf32> to vector<8x128xbf16>
    %cst_17 = arith.constant dense<0.000000e+00> : vector<8x128xf32>
    %30 = tpu.matmul %29, %28, %cst_17 {dimension_numbers = #tpu.dot_dimension_numbers<[1], [0], [0], [1], [0, 0, 1, 1], [], []>} : vector<8x128xbf16>, vector<128x128xbf16>, vector<8x128xf32> -> vector<8x128xf32>
    %c24 = arith.constant 24 : index
    %c0_18 = arith.constant 0 : index
    %31 = vector.load %arg3[%c24, %c0_18] : memref<72x256xf32, #tpu.memory_space<vmem>>, vector<1x128xf32>
    %32 = vector.broadcast %31 : vector<1x128xf32> to vector<8x128xf32>
    %33 = arith.addf %30, %32 : vector<8x128xf32>
    %cst_19 = arith.constant 0.000000e+00 : f32
    %34 = vector.broadcast %cst_19 : f32 to vector<8x128xf32>
    %35 = arith.maximumf %33, %34 : vector<8x128xf32>
    %c400 = arith.constant 400 : index
    %c0_20 = arith.constant 0 : index
    %36 = vector.load %arg2[%c400, %c0_20] : memref<1552x256xbf16, #tpu.memory_space<vmem>>, vector<128x256xbf16>
    %37 = arith.truncf %35 : vector<8x128xf32> to vector<8x128xbf16>
    %cst_21 = arith.constant dense<0.000000e+00> : vector<8x256xf32>
    %38 = tpu.matmul %37, %36, %cst_21 {dimension_numbers = #tpu.dot_dimension_numbers<[1], [0], [0], [1], [0, 0, 1, 1], [], []>} : vector<8x128xbf16>, vector<128x256xbf16>, vector<8x256xf32> -> vector<8x256xf32>
    %c32 = arith.constant 32 : index
    %c0_22 = arith.constant 0 : index
    %39 = vector.load %arg3[%c32, %c0_22] : memref<72x256xf32, #tpu.memory_space<vmem>>, vector<1x256xf32>
    %40 = vector.broadcast %39 : vector<1x256xf32> to vector<8x256xf32>
    %41 = arith.addf %38, %40 : vector<8x256xf32>
    %cst_23 = arith.constant 0.000000e+00 : f32
    %42 = vector.broadcast %cst_23 : f32 to vector<8x256xf32>
    %43 = arith.maximumf %41, %42 : vector<8x256xf32>
    %c528 = arith.constant 528 : index
    %c0_24 = arith.constant 0 : index
    %44 = vector.load %arg2[%c528, %c0_24] : memref<1552x256xbf16, #tpu.memory_space<vmem>>, vector<256x256xbf16>
    %45 = arith.truncf %43 : vector<8x256xf32> to vector<8x256xbf16>
    %cst_25 = arith.constant dense<0.000000e+00> : vector<8x256xf32>
    %46 = tpu.matmul %45, %44, %cst_25 {dimension_numbers = #tpu.dot_dimension_numbers<[1], [0], [0], [1], [0, 0, 1, 1], [], []>} : vector<8x256xbf16>, vector<256x256xbf16>, vector<8x256xf32> -> vector<8x256xf32>
    %c40 = arith.constant 40 : index
    %c0_26 = arith.constant 0 : index
    %47 = vector.load %arg3[%c40, %c0_26] : memref<72x256xf32, #tpu.memory_space<vmem>>, vector<1x256xf32>
    %48 = vector.broadcast %47 : vector<1x256xf32> to vector<8x256xf32>
    %49 = arith.addf %46, %48 : vector<8x256xf32>
    %cst_27 = arith.constant 0.000000e+00 : f32
    %50 = vector.broadcast %cst_27 : f32 to vector<8x256xf32>
    %51 = arith.maximumf %49, %50 : vector<8x256xf32>
    %c784 = arith.constant 784 : index
    %c0_28 = arith.constant 0 : index
    %52 = vector.load %arg2[%c784, %c0_28] : memref<1552x256xbf16, #tpu.memory_space<vmem>>, vector<256x256xbf16>
    %53 = arith.truncf %51 : vector<8x256xf32> to vector<8x256xbf16>
    %cst_29 = arith.constant dense<0.000000e+00> : vector<8x256xf32>
    %54 = tpu.matmul %53, %52, %cst_29 {dimension_numbers = #tpu.dot_dimension_numbers<[1], [0], [0], [1], [0, 0, 1, 1], [], []>} : vector<8x256xbf16>, vector<256x256xbf16>, vector<8x256xf32> -> vector<8x256xf32>
    %c48 = arith.constant 48 : index
    %c0_30 = arith.constant 0 : index
    %55 = vector.load %arg3[%c48, %c0_30] : memref<72x256xf32, #tpu.memory_space<vmem>>, vector<1x256xf32>
    %56 = vector.broadcast %55 : vector<1x256xf32> to vector<8x256xf32>
    %57 = arith.addf %54, %56 : vector<8x256xf32>
    %cst_31 = arith.constant 0.000000e+00 : f32
    %58 = vector.broadcast %cst_31 : f32 to vector<8x256xf32>
    %59 = arith.maximumf %57, %58 : vector<8x256xf32>
    %c1040 = arith.constant 1040 : index
    %c0_32 = arith.constant 0 : index
    %60 = vector.load %arg2[%c1040, %c0_32] : memref<1552x256xbf16, #tpu.memory_space<vmem>>, vector<256x256xbf16>
    %61 = arith.truncf %59 : vector<8x256xf32> to vector<8x256xbf16>
    %cst_33 = arith.constant dense<0.000000e+00> : vector<8x256xf32>
    %62 = tpu.matmul %61, %60, %cst_33 {dimension_numbers = #tpu.dot_dimension_numbers<[1], [0], [0], [1], [0, 0, 1, 1], [], []>} : vector<8x256xbf16>, vector<256x256xbf16>, vector<8x256xf32> -> vector<8x256xf32>
    %c56 = arith.constant 56 : index
    %c0_34 = arith.constant 0 : index
    %63 = vector.load %arg3[%c56, %c0_34] : memref<72x256xf32, #tpu.memory_space<vmem>>, vector<1x256xf32>
    %64 = vector.broadcast %63 : vector<1x256xf32> to vector<8x256xf32>
    %65 = arith.addf %62, %64 : vector<8x256xf32>
    %cst_35 = arith.constant 0.000000e+00 : f32
    %66 = vector.broadcast %cst_35 : f32 to vector<8x256xf32>
    %67 = arith.maximumf %65, %66 : vector<8x256xf32>
    %c1296 = arith.constant 1296 : index
    %c0_36 = arith.constant 0 : index
    %68 = vector.load %arg2[%c1296, %c0_36] : memref<1552x256xbf16, #tpu.memory_space<vmem>>, vector<256x128xbf16>
    %69 = arith.truncf %67 : vector<8x256xf32> to vector<8x256xbf16>
    %cst_37 = arith.constant dense<0.000000e+00> : vector<8x128xf32>
    %70 = tpu.matmul %69, %68, %cst_37 {dimension_numbers = #tpu.dot_dimension_numbers<[1], [0], [0], [1], [0, 0, 1, 1], [], []>} : vector<8x256xbf16>, vector<256x128xbf16>, vector<8x128xf32> -> vector<8x128xf32>
    %c64 = arith.constant 64 : index
    %c0_38 = arith.constant 0 : index
    %71 = vector.load %arg3[%c64, %c0_38] : memref<72x256xf32, #tpu.memory_space<vmem>>, vector<1x128xf32>
    %72 = vector.broadcast %71 : vector<1x128xf32> to vector<8x128xf32>
    %73 = arith.addf %70, %72 : vector<8x128xf32>
    %c0_39 = arith.constant 0 : index
    %c0_40 = arith.constant 0 : index
    %74 = vector.load %arg4[%c0_39, %c0_40] : memref<8x128xf32, #tpu.memory_space<vmem>>, vector<8x128xf32>
    tpu.vector_store %arg4[%c0_39, %c0_40], %73 {strides = array<i32>} : memref<8x128xf32, #tpu.memory_space<vmem>>, vector<8x128xf32>,
    return
  }
  func.func @transform_0(%arg0: i32) -> (i32, i32) {
    %c0_i32 = arith.constant 0 : i32
    %c0_i32_0 = arith.constant 0 : i32
    return %arg0, %c0_i32 : i32, i32
  }
  func.func @transform_1(%arg0: i32) -> (i32, i32) {
    %c0_i32 = arith.constant 0 : i32
    %c0_i32_0 = arith.constant 0 : i32
    %c0_i32_1 = arith.constant 0 : i32
    return %c0_i32, %c0_i32_0 : i32, i32
  }
  func.func @transform_2(%arg0: i32) -> (i32, i32) {
    %c0_i32 = arith.constant 0 : i32
    %c0_i32_0 = arith.constant 0 : i32
    %c0_i32_1 = arith.constant 0 : i32
    return %c0_i32, %c0_i32_0 : i32, i32
  }
  func.func @transform_3(%arg0: i32) -> (i32, i32) {
    %c0_i32 = arith.constant 0 : i32
    %c0_i32_0 = arith.constant 0 : i32
    return %arg0, %c0_i32 : i32, i32
  }
}

</mosaic_0001>

<llo_original>
// kernel: tpu_custom_call.1
$region0: #{tpu_custom_call.1}
  #allocation0 [shape = 'u32[]', space=smem, size = 0x4, offset = 0x4, fixed_abs, tag = 'smem constant byte address 0x4 - core index']
  #allocation1 [shape = 'u32[144,128]{1,0:T(1,128)}', space=vmem, size = 0x12000, scoped, tag = 'internal scratch']
  %s0 = inlined_call_operand.hbm [shape: f32[16,16], index: 0, kind: input, shape index: {}]
  %s1 = inlined_call_operand.hbm [shape: bf16[1552,256], index: 1, kind: input, shape index: {}]
  %s2 = inlined_call_operand.hbm [shape: f32[72,256], index: 2, kind: input, shape index: {}]
  %s3 = inlined_call_operand.hbm [shape: f32[16,128], index: 3, kind: output, shape index: {}]
  %s4 = sld [smem:[#allocation0]]
  $region57: #{tpu_custom_call.1} parent=0
    _
  %s6 = ssub.s32 1, %s4
  %s7 = scalar_select 0, %s6, %s4
  $region1: #{tpu_custom_call.1} parent=0
    #allocation2 [shape = 'u8[8192]{0}', space=vmem, size = 0x2000, scoped, tag = 'input window, operand 0']
    #allocation3 [shape = 's32[2]{0}', space=sflag, size = 0x8, scoped, tag = 'scoped memory for tpu_custom_call.1']
    #allocation4 [shape = 's32[2]{0}', space=sflag, size = 0x8, scoped, tag = 'scoped memory for tpu_custom_call.1']
    #allocation5 [shape = 'u8[794624]{0}', space=vmem, size = 0xc2000, scoped, tag = 'input window, operand 1, single buffered']
    #allocation6 [shape = 's32[1]{0}', space=sflag, size = 0x4, scoped, tag = 'scoped memory for tpu_custom_call.1']
    #allocation7 [shape = 'u8[73728]{0}', space=vmem, size = 0x12000, scoped, tag = 'input window, operand 2, single buffered']
    #allocation8 [shape = 'u8[8192]{0}', space=vmem, size = 0x2000, scoped, tag = 'output window, operand 0']
    %8 = vsyncpa [#allocation3], 0
    %s9 = scalar_lea.sflag [#allocation3], 1
    %10 = vsyncpa %s9, 0
    %11 = vsyncpa [#allocation6], 0
    %12 = vsyncpa [#allocation4], 0
    %s13 = scalar_lea.sflag [#allocation4], 1
    %14 = vsyncpa %s13, 0
    loop: start=0, step=1, limit=4
    $region2: #{tpu_custom_call.1} parent=1 // loop_pre_header
      _
    $region3: #{tpu_custom_call.1} parent=1 // loop_header
      %s16 = sphi 0, %s20
      %p17 = scmp.ge.s32.totalorder %s16, 4
      %s26 = sphi 0, %s28
      %s29 = sphi 0, %s26
      %s30 = sphi 0, %s29
      %s46 = sphi 0, %s30
      %s50 = sphi 0, %s50
      %s52 = sphi 0, %s50
      %s53 = sphi 0, %s52
      %s67 = sphi 0, %s53
      %s71 = sphi 0, %s71
      %s73 = sphi 0, %s71
      %s74 = sphi 0, %s73
      %s88 = sphi 0, %s74
      %s94 = sphi 0, %s96
      %s97 = sphi 0, %s94
      %s98 = sphi 0, %s97
      %s114 = sphi 0, %s98
    $region4: #{tpu_custom_call.1} parent=1 // loop_header_branch
      %19 = sbr.rel (%p17) target = $region8
    $region5: #{tpu_custom_call.1} parent=1 // loop_body
      %s21 = ssub.s32 %s16, 1
      %s22 = ssub.s32 %s16, 2
      %s23 = sadd.s32 %s16, 1
      %s24 = ssub.s32 %s16, %s23
      %p25 = scmp.eq.s32.totalorder %s24, 0
      %s27 = sadd.s32 %s26, 1
      %s28 = scalar_select %p25, %s26, %s27
      %p31 = pneg %p25
      %p32 = scmp.eq.s32.totalorder %s16, 1
      %p33 = por %p31, %p32
      %p34 = scmp.ne.s32.totalorder %s26, %s29
      %p35 = scmp.eq.s32.totalorder %s16, 0
      %p36 = por %p34, %p35
      %p37 = scmp.ne.s32.totalorder %s26, %s29
      %p38 = scmp.eq.s32.totalorder %s21, 1
      %p39 = por %p37, %p38
      %p40 = scmp.ne.s32.totalorder %s29, %s30
      %p41 = scmp.eq.s32.totalorder %s21, 0
      %p42 = por %p40, %p41
      %p43 = scmp.ne.s32.totalorder %s29, %s30
      %p44 = scmp.eq.s32.totalorder %s22, 1
      %p45 = por %p43, %p44
      %p47 = scmp.ne.s32.totalorder %s30, %s46
      %p48 = scmp.eq.s32.totalorder %s22, 0
      %p49 = por %p47, %p48
      %s51 = sadd.s32 %s50, 1
      %p54 = scmp.eq.s32.totalorder %s16, 1
      %p55 = scmp.ne.s32.totalorder %s50, %s52
      %p56 = scmp.eq.s32.totalorder %s16, 0
      %p57 = por %p55, %p56
      %p58 = scmp.ne.s32.totalorder %s50, %s52
      %p59 = scmp.eq.s32.totalorder %s21, 1
      %p60 = por %p58, %p59
      %p61 = scmp.ne.s32.totalorder %s52, %s53
      %p62 = scmp.eq.s32.totalorder %s21, 0
      %p63 = por %p61, %p62
      %p64 = scmp.ne.s32.totalorder %s52, %s53
      %p65 = scmp.eq.s32.totalorder %s22, 1
      %p66 = por %p64, %p65
      %p68 = scmp.ne.s32.totalorder %s53, %s67
      %p69 = scmp.eq.s32.totalorder %s22, 0
      %p70 = por %p68, %p69
      %s72 = sadd.s32 %s71, 1
      %p75 = scmp.eq.s32.totalorder %s16, 1
      %p76 = scmp.ne.s32.totalorder %s71, %s73
      %p77 = scmp.eq.s32.totalorder %s16, 0
      %p78 = por %p76, %p77
      %p79 = scmp.ne.s32.totalorder %s71, %s73
      %p80 = scmp.eq.s32.totalorder %s21, 1
      %p81 = por %p79, %p80
      %p82 = scmp.ne.s32.totalorder %s73, %s74
      %p83 = scmp.eq.s32.totalorder %s21, 0
      %p84 = por %p82, %p83
      %p85 = scmp.ne.s32.totalorder %s73, %s74
      %p86 = scmp.eq.s32.totalorder %s22, 1
      %p87 = por %p85, %p86
      %p89 = scmp.ne.s32.totalorder %s74, %s88
      %p90 = scmp.eq.s32.totalorder %s22, 0
      %p91 = por %p89, %p90
      %s92 = ssub.s32 %s16, %s23
      %p93 = scmp.eq.s32.totalorder %s92, 0
      %s95 = sadd.s32 %s94, 1
      %s96 = scalar_select %p93, %s94, %s95
      %p99 = pneg %p93
      %p100 = scmp.eq.s32.totalorder %s16, 1
      %p101 = por %p99, %p100
      %p102 = scmp.ne.s32.totalorder %s94, %s97
      %p103 = scmp.eq.s32.totalorder %s16, 0
      %p104 = por %p102, %p103
      %p105 = scmp.ne.s32.totalorder %s94, %s97
      %p106 = scmp.eq.s32.totalorder %s21, 1
      %p107 = por %p105, %p106
      %p108 = scmp.ne.s32.totalorder %s97, %s98
      %p109 = scmp.eq.s32.totalorder %s21, 0
      %p110 = por %p108, %p109
      %p111 = scmp.ne.s32.totalorder %s97, %s98
      %p112 = scmp.eq.s32.totalorder %s22, 1
      %p113 = por %p111, %p112
      %p115 = scmp.ne.s32.totalorder %s98, %s114
      %p116 = scmp.eq.s32.totalorder %s22, 0
      %p117 = por %p115, %p116
      %p118 = scmp.le.s32.totalorder 1, %s16
      %p119 = scmp.lt.s32.totalorder %s16, 3
      %p120 = pnand %p118, %p119
      %p121 = pneg %p120
      // Predicated region
      $region9: #{tpu_custom_call.1} parent=5 // pred_check
        _
      $region10: #{tpu_custom_call.1} parent=5 // pred_check_branch
        %123 = sbr.rel (%p120) target = $region12
      $region11: #{tpu_custom_call.1} parent=5 // pred_region
        %s124 = ssub.s32 %s16, 1
        // Predicated region
        $region13: #{tpu_custom_call.1} parent=11 // pred_check
          %p125 = pneg %p63
        $region14: #{tpu_custom_call.1} parent=11 // pred_check_branch
          %127 = sbr.rel (%p125) target = $region16
        $region15: #{tpu_custom_call.1} parent=11 // pred_region
          %s129 = ssub.s32 24832, 24832
          %130 = vsyncadd [#allocation6], %s129
          %s131 = sshll.u32 [#allocation5], 4
          %s132 = int_to_ptr.vmem [resolvable:$true] %s131
          %137 = dma.hbm_to_vmem [thread:$0]  %s1, 24832, %s132, [#allocation6], 128, 128, 8
        $region16: #{tpu_custom_call.1} parent=11 // pred_fallthru
          _
        // Predicated region
        $region17: #{tpu_custom_call.1} parent=11 // pred_check
          %p138 = pneg %p84
        $region18: #{tpu_custom_call.1} parent=11 // pred_check_branch
          %140 = sbr.rel (%p138) target = $region20
        $region19: #{tpu_custom_call.1} parent=11 // pred_region
          %s142 = ssub.s32 2304, 2304
          %143 = vsyncadd [#allocation6], %s142
          %s144 = sshll.u32 [#allocation7], 4
          %s145 = int_to_ptr.vmem [resolvable:$true] %s144
          %150 = dma.hbm_to_vmem [thread:$0]  %s2, 2304, %s145, [#allocation6], 256, 256, 16
        $region20: #{tpu_custom_call.1} parent=11 // pred_fallthru
          _
      $region12: #{tpu_custom_call.1} parent=5 // pred_fallthru
        _
      %p151 = scmp.lt.s32.totalorder %s16, 2
      // Predicated region
      $region21: #{tpu_custom_call.1} parent=5 // pred_check
        %p152 = pneg %p151
      $region22: #{tpu_custom_call.1} parent=5 // pred_check_branch
        %154 = sbr.rel (%p152) target = $region24
      $region23: #{tpu_custom_call.1} parent=5 // pred_region
        // Predicated region
        $region25: #{tpu_custom_call.1} parent=23 // pred_check
          %p155 = pneg %p36
        $region26: #{tpu_custom_call.1} parent=23 // pred_check_branch
          %157 = sbr.rel (%p155) target = $region28
        $region27: #{tpu_custom_call.1} parent=23 // pred_region
          %s158 = sand.u32 %s26, 1
          %s159 = scalar_lea.sflag [#allocation3], %s158
          %s160 = sand.u32 %s26, 1
          %s161 = smul.addr %s160, 8
          %s162 = scalar_lea.vmem [#allocation2], %s161
          %s164 = ssub.s32 128, 128
          %165 = vsyncadd %s159, %s164
          %s166 = smul.addr %s16, 128
          %s167 = scalar_lea.hbm %s0, %s166
          %s169 = sshll.u32 %s162, 4
          %s170 = int_to_ptr.vmem [resolvable:$true] %s169
          %172 = dma.hbm_to_vmem [thread:$0]  %s167, 128, %s170, %s159
        $region28: #{tpu_custom_call.1} parent=23 // pred_fallthru
          _
      $region24: #{tpu_custom_call.1} parent=5 // pred_fallthru
        _
      %p173 = scmp.le.s32.totalorder 1, %s16
      %p174 = scmp.lt.s32.totalorder %s16, 3
      %p175 = pnand %p173, %p174
      %p176 = pneg %p175
      // Predicated region
      $region29: #{tpu_custom_call.1} parent=5 // pred_check
        _
      $region30: #{tpu_custom_call.1} parent=5 // pred_check_branch
        %178 = sbr.rel (%p175) target = $region32
      $region31: #{tpu_custom_call.1} parent=5 // pred_region
        %s179 = ssub.s32 %s16, 1
        %s180 = sand.u32 %s29, 1
        %s181 = scalar_lea.sflag [#allocation3], %s180
        %s182 = sand.u32 %s29, 1
        %s183 = smul.addr %s182, 8
        %s184 = scalar_lea.vmem [#allocation2], %s183
        // Predicated region
        $region33: #{tpu_custom_call.1} parent=31 // pred_check
          %p185 = pneg %p42
        $region34: #{tpu_custom_call.1} parent=31 // pred_check_branch
          %187 = sbr.rel (%p185) target = $region36
        $region35: #{tpu_custom_call.1} parent=31 // pred_region
          %188 = dma.done %s181, 128
        $region36: #{tpu_custom_call.1} parent=31 // pred_fallthru
          _
        // Predicated region
        $region37: #{tpu_custom_call.1} parent=31 // pred_check
          %p189 = pneg %p63
        $region38: #{tpu_custom_call.1} parent=31 // pred_check_branch
          %191 = sbr.rel (%p189) target = $region40
        $region39: #{tpu_custom_call.1} parent=31 // pred_region
          %192 = dma.done [#allocation6], 24832
        $region40: #{tpu_custom_call.1} parent=31 // pred_fallthru
          _
        // Predicated region
        $region41: #{tpu_custom_call.1} parent=31 // pred_check
          %p193 = pneg %p84
        $region42: #{tpu_custom_call.1} parent=31 // pred_check_branch
          %195 = sbr.rel (%p193) target = $region44
        $region43: #{tpu_custom_call.1} parent=31 // pred_region
          %196 = dma.done [#allocation6], 2304
        $region44: #{tpu_custom_call.1} parent=31 // pred_fallthru
          _
        %s197 = sand.u32 %s29, 1
        %s198 = scalar_lea.sflag [#allocation3], %s197
        %s199 = sand.u32 %s29, 1
        %s200 = smul.addr %s199, 8
        %s201 = scalar_lea.vmem [#allocation2], %s200
        %p202 = pneg %p42
        %p203 = pneg %p39
        %p204 = pneg %p63
        %p205 = pneg %p60
        %p206 = pneg %p84
        %p207 = pneg %p81
        %p208 = pneg %p110
        %p209 = pneg %p107
        %s210 = sand.u32 %s97, 1
        %s211 = scalar_lea.sflag [#allocation4], %s210
        %s212 = sand.u32 %s97, 1
        %s213 = smul.addr %s212, 8
        %s214 = scalar_lea.vmem [#allocation8], %s213
        %v216 = vld [vmem:[%s184] sm:$0xff]
        %v217 = vlog2.pop %v216
        %v218 = vmul.f32 %v217, 0.6931472
        %v219 = vmul.f32 %v218, 0.4342945
        %v220 = vld [vmem:[#allocation5] sm:$0xf]
        %v221 = vld [vmem:[#allocation5 + $0x8] sm:$0xf]
        %v222 = vpack.c.bf16 %v219, %v219
        %v223 = vld [vmem:[#allocation7] ss:$0 sm:$0xff]
        %v226 = vunpack.c.l.b16 %v220
        %v227 = vunpack.c.l.b16 %v221
        %v228 = vpack.c.b16 %v227, %v226
        %vm230 = vcmask 130048
        %v232 = vsel %vm230, %v222, 0
        %234 = vmatprep.subr.bf16.mxu0 0
        %235 = vmatpush1.bf16.msra.mxu0 %v228
        %236 = vmatprep.subr.bf16.mxu0 0
        %237 = vmatpush1.bf16.msra.mxu0 0
        %238 = vmatprep.subr.bf16.mxu0 0
        %239 = vmatpush1.bf16.msra.mxu0 0
        %240 = vmatprep.subr.bf16.mxu0 0
        %241 = vmatpush1.bf16.msra.mxu0 0
        %242 = vmatprep.subr.bf16.mxu0 0
        %243 = vmatpush1.bf16.msra.mxu0 0
        %244 = vmatprep.subr.bf16.mxu0 0
        %245 = vmatpush1.bf16.msra.mxu0 0
        %246 = vmatprep.subr.bf16.mxu0 0
        %247 = vmatpush1.bf16.msra.mxu0 0
        %248 = vmatprep.subr.bf16.mxu0 0
        %249 = vmatpush1.bf16.msra.mxu0 0
        %250 = vmatprep.subr.bf16.mxu0 0
        %251 = vmatpush1.bf16.msra.mxu0 0
        %252 = vmatprep.subr.bf16.mxu0 0
        %253 = vmatpush1.bf16.msra.mxu0 0
        %254 = vmatprep.subr.bf16.mxu0 0
        %255 = vmatpush1.bf16.msra.mxu0 0
        %256 = vmatprep.subr.bf16.mxu0 0
        %257 = vmatpush1.bf16.msra.mxu0 0
        %258 = vmatprep.subr.bf16.mxu0 0
        %259 = vmatpush1.bf16.msra.mxu0 0
        %260 = vmatprep.subr.bf16.mxu0 0
        %261 = vmatpush1.bf16.msra.mxu0 0
        %262 = vmatprep.subr.bf16.mxu0 0
        %263 = vmatpush1.bf16.msra.mxu0 0
        %264 = vmatprep.subr.bf16.mxu0 0
        %265 = vmatpush1.bf16.msra.mxu0 0
        %266 = vmatprep.mubr.bf16.mxu0 0
        %267 = vmatmul.mubr.bf16.gmra.mrb[0].mxu0 %v232
        %v268 = vpop.f32.mrb[0].mxu0
        %v269 = vadd.f32 %v223, %v268
        %v270 = vpop.f32.mrb[0].mxu0
        %v271 = vpop.f32.mrb[0].mxu0
        %v272 = vpop.f32.mrb[0].mxu0
        %273 = vdwg.mxu0
        %v274 = vmax.f32 %v269, 0.0
        %v275 = vld [vmem:[#allocation5 + $0x10] sm:$0xf]
        %v276 = vld [vmem:[#allocation5 + $0x18] sm:$0xf]
        %v277 = vld [vmem:[#allocation5 + $0x20] sm:$0xf]
        %v278 = vld [vmem:[#allocation5 + $0x28] sm:$0xf]
        %v279 = vld [vmem:[#allocation5 + $0x30] sm:$0xf]
        %v280 = vld [vmem:[#allocation5 + $0x38] sm:$0xf]
        %v281 = vld [vmem:[#allocation5 + $0x40] sm:$0xf]
        %v282 = vld [vmem:[#allocation5 + $0x48] sm:$0xf]
        %v283 = vld [vmem:[#allocation5 + $0x50] sm:$0xf]
        %v284 = vld [vmem:[#allocation5 + $0x58] sm:$0xf]
        %v285 = vld [vmem:[#allocation5 + $0x60] sm:$0xf]
        %v286 = vld [vmem:[#allocation5 + $0x68] sm:$0xf]
        %v287 = vld [vmem:[#allocation5 + $0x70] sm:$0xf]
        %v288 = vld [vmem:[#allocation5 + $0x78] sm:$0xf]
        %v289 = vld [vmem:[#allocation5 + $0x80] sm:$0xf]
        %v290 = vld [vmem:[#allocation5 + $0x88] sm:$0xf]
        %v291 = vpack.c.bf16 %v274, %v274
        %v292 = vld [vmem:[#allocation7 + $0x10] ss:$0 sm:$0xff]
        %v309 = vunpack.c.l.b16 %v275
        %v310 = vunpack.c.l.b16 %v276
        %v311 = vunpack.c.l.b16 %v277
        %v312 = vunpack.c.l.b16 %v278
        %v313 = vunpack.c.l.b16 %v279
        %v314 = vunpack.c.l.b16 %v280
        %v315 = vunpack.c.l.b16 %v281
        %v316 = vunpack.c.l.b16 %v282
        %v317 = vunpack.c.l.b16 %v283
        %v318 = vunpack.c.l.b16 %v284
        %v319 = vunpack.c.l.b16 %v285
        %v320 = vunpack.c.l.b16 %v286
        %v321 = vunpack.c.l.b16 %v287
        %v322 = vunpack.c.l.b16 %v288
        %v323 = vunpack.c.l.b16 %v289
        %v324 = vunpack.c.l.b16 %v290
        %v325 = vpack.c.b16 %v310, %v309
        %v326 = vpack.c.b16 %v312, %v311
        %v327 = vpack.c.b16 %v314, %v313
        %v328 = vpack.c.b16 %v316, %v315
        %v329 = vpack.c.b16 %v318, %v317
        %v330 = vpack.c.b16 %v320, %v319
        %v331 = vpack.c.b16 %v322, %v321
        %v332 = vpack.c.b16 %v324, %v323
        %341 = vmatprep.subr.bf16.mxu0 0
        %342 = vmatpush1.bf16.msra.mxu0 %v325
        %343 = vmatprep.subr.bf16.mxu0 0
        %344 = vmatpush1.bf16.msra.mxu0 %v326
        %345 = vmatprep.subr.bf16.mxu0 0
        %346 = vmatpush1.bf16.msra.mxu0 %v327
        %347 = vmatprep.subr.bf16.mxu0 0
        %348 = vmatpush1.bf16.msra.mxu0 %v328
        %349 = vmatprep.subr.bf16.mxu0 0
        %350 = vmatpush1.bf16.msra.mxu0 %v329
        %351 = vmatprep.subr.bf16.mxu0 0
        %352 = vmatpush1.bf16.msra.mxu0 %v330
        %353 = vmatprep.subr.bf16.mxu0 0
        %354 = vmatpush1.bf16.msra.mxu0 %v331
        %355 = vmatprep.subr.bf16.mxu0 0
        %356 = vmatpush1.bf16.msra.mxu0 %v332
        %357 = vmatprep.subr.bf16.mxu0 0
        %358 = vmatpush1.bf16.msra.mxu0 0
        %359 = vmatprep.subr.bf16.mxu0 0
        %360 = vmatpush1.bf16.msra.mxu0 0
        %361 = vmatprep.subr.bf16.mxu0 0
        %362 = vmatpush1.bf16.msra.mxu0 0
        %363 = vmatprep.subr.bf16.mxu0 0
        %364 = vmatpush1.bf16.msra.mxu0 0
        %365 = vmatprep.subr.bf16.mxu0 0
        %366 = vmatpush1.bf16.msra.mxu0 0
        %367 = vmatprep.subr.bf16.mxu0 0
        %368 = vmatpush1.bf16.msra.mxu0 0
        %369 = vmatprep.subr.bf16.mxu0 0
        %370 = vmatpush1.bf16.msra.mxu0 0
        %371 = vmatprep.subr.bf16.mxu0 0
        %372 = vmatpush1.bf16.msra.mxu0 0
        %373 = vmatprep.mubr.bf16.mxu0 0
        %374 = vmatmul.mubr.bf16.gmra.mrb[0].mxu0 %v291
        %v375 = vpop.f32.mrb[0].mxu0
        %v376 = vadd.f32 %v292, %v375
        %v377 = vpop.f32.mrb[0].mxu0
        %v378 = vpop.f32.mrb[0].mxu0
        %v379 = vpop.f32.mrb[0].mxu0
        %380 = vdwg.mxu0
        %v381 = vmax.f32 %v376, 0.0
        %v382 = vld [vmem:[#allocation5 + $0x90] sm:$0xf]
        %v383 = vld [vmem:[#allocation5 + $0x98] sm:$0xf]
        %v384 = vld [vmem:[#allocation5 + $0xa0] sm:$0xf]
        %v385 = vld [vmem:[#allocation5 + $0xa8] sm:$0xf]
        %v386 = vld [vmem:[#allocation5 + $0xb0] sm:$0xf]
        %v387 = vld [vmem:[#allocation5 + $0xb8] sm:$0xf]
        %v388 = vld [vmem:[#allocation5 + $0xc0] sm:$0xf]
        %v389 = vld [vmem:[#allocation5 + $0xc8] sm:$0xf]
        %v390 = vld [vmem:[#allocation5 + $0xd0] sm:$0xf]
        %v391 = vld [vmem:[#allocation5 + $0xd8] sm:$0xf]
        %v392 = vld [vmem:[#allocation5 + $0xe0] sm:$0xf]
        %v393 = vld [vmem:[#allocation5 + $0xe8] sm:$0xf]
        %v394 = vld [vmem:[#allocation5 + $0xf0] sm:$0xf]
        %v395 = vld [vmem:[#allocation5 + $0xf8] sm:$0xf]
        %v396 = vld [vmem:[#allocation5 + $0x100] sm:$0xf]
        %v397 = vld [vmem:[#allocation5 + $0x108] sm:$0xf]
        %v398 = vpack.c.bf16 %v381, %v381
        %v399 = vld [vmem:[#allocation7 + $0x20] ss:$0 sm:$0xff]
        %v416 = vunpack.c.l.b16 %v382
        %v417 = vunpack.c.l.b16 %v383
        %v418 = vunpack.c.l.b16 %v384
        %v419 = vunpack.c.l.b16 %v385
        %v420 = vunpack.c.l.b16 %v386
        %v421 = vunpack.c.l.b16 %v387
        %v422 = vunpack.c.l.b16 %v388
        %v423 = vunpack.c.l.b16 %v389
        %v424 = vunpack.c.l.b16 %v390
        %v425 = vunpack.c.l.b16 %v391
        %v426 = vunpack.c.l.b16 %v392
        %v427 = vunpack.c.l.b16 %v393
        %v428 = vunpack.c.l.b16 %v394
        %v429 = vunpack.c.l.b16 %v395
        %v430 = vunpack.c.l.b16 %v396
        %v431 = vunpack.c.l.b16 %v397
        %v432 = vpack.c.b16 %v417, %v416
        %v433 = vpack.c.b16 %v419, %v418
        %v434 = vpack.c.b16 %v421, %v420
        %v435 = vpack.c.b16 %v423, %v422
        %v436 = vpack.c.b16 %v425, %v424
        %v437 = vpack.c.b16 %v427, %v426
        %v438 = vpack.c.b16 %v429, %v428
        %v439 = vpack.c.b16 %v431, %v430
        %448 = vmatprep.subr.bf16.mxu0 0
        %449 = vmatpush1.bf16.msra.mxu0 %v432
        %450 = vmatprep.subr.bf16.mxu0 0
        %451 = vmatpush1.bf16.msra.mxu0 %v433
        %452 = vmatprep.subr.bf16.mxu0 0
        %453 = vmatpush1.bf16.msra.mxu0 %v434
        %454 = vmatprep.subr.bf16.mxu0 0
        %455 = vmatpush1.bf16.msra.mxu0 %v435
        %456 = vmatprep.subr.bf16.mxu0 0
        %457 = vmatpush1.bf16.msra.mxu0 %v436
        %458 = vmatprep.subr.bf16.mxu0 0
        %459 = vmatpush1.bf16.msra.mxu0 %v437
        %460 = vmatprep.subr.bf16.mxu0 0
        %461 = vmatpush1.bf16.msra.mxu0 %v438
        %462 = vmatprep.subr.bf16.mxu0 0
        %463 = vmatpush1.bf16.msra.mxu0 %v439
        %464 = vmatprep.subr.bf16.mxu0 0
        %465 = vmatpush1.bf16.msra.mxu0 0
        %466 = vmatprep.subr.bf16.mxu0 0
        %467 = vmatpush1.bf16.msra.mxu0 0
        %468 = vmatprep.subr.bf16.mxu0 0
        %469 = vmatpush1.bf16.msra.mxu0 0
        %470 = vmatprep.subr.bf16.mxu0 0
        %471 = vmatpush1.bf16.msra.mxu0 0
        %472 = vmatprep.subr.bf16.mxu0 0
        %473 = vmatpush1.bf16.msra.mxu0 0
        %474 = vmatprep.subr.bf16.mxu0 0
        %475 = vmatpush1.bf16.msra.mxu0 0
        %476 = vmatprep.subr.bf16.mxu0 0
        %477 = vmatpush1.bf16.msra.mxu0 0
        %478 = vmatprep.subr.bf16.mxu0 0
        %479 = vmatpush1.bf16.msra.mxu0 0
        %480 = vmatprep.mubr.bf16.mxu0 0
        %481 = vmatmul.mubr.bf16.gmra.mrb[0].mxu0 %v398
        %v482 = vpop.f32.mrb[0].mxu0
        %v483 = vadd.f32 %v399, %v482
        %v484 = vpop.f32.mrb[0].mxu0
        %v485 = vpop.f32.mrb[0].mxu0
        %v486 = vpop.f32.mrb[0].mxu0
        %487 = vdwg.mxu0
        %v488 = vmax.f32 %v483, 0.0
        %v489 = vld [vmem:[#allocation5 + $0x110] sm:$0xf]
        %v490 = vld [vmem:[#allocation5 + $0x118] sm:$0xf]
        %v491 = vld [vmem:[#allocation5 + $0x120] sm:$0xf]
        %v492 = vld [vmem:[#allocation5 + $0x128] sm:$0xf]
        %v493 = vld [vmem:[#allocation5 + $0x130] sm:$0xf]
        %v494 = vld [vmem:[#allocation5 + $0x138] sm:$0xf]
        %v495 = vld [vmem:[#allocation5 + $0x140] sm:$0xf]
        %v496 = vld [vmem:[#allocation5 + $0x148] sm:$0xf]
        %v497 = vld [vmem:[#allocation5 + $0x150] sm:$0xf]
        %v498 = vld [vmem:[#allocation5 + $0x158] sm:$0xf]
        %v499 = vld [vmem:[#allocation5 + $0x160] sm:$0xf]
        %v500 = vld [vmem:[#allocation5 + $0x168] sm:$0xf]
        %v501 = vld [vmem:[#allocation5 + $0x170] sm:$0xf]
        %v502 = vld [vmem:[#allocation5 + $0x178] sm:$0xf]
        %v503 = vld [vmem:[#allocation5 + $0x180] sm:$0xf]
        %v504 = vld [vmem:[#allocation5 + $0x188] sm:$0xf]
        %v505 = vpack.c.bf16 %v488, %v488
        %v506 = vld [vmem:[#allocation7 + $0x30] ss:$0 sm:$0xff]
        %v523 = vunpack.c.l.b16 %v489
        %v524 = vunpack.c.l.b16 %v490
        %v525 = vunpack.c.l.b16 %v491
        %v526 = vunpack.c.l.b16 %v492
        %v527 = vunpack.c.l.b16 %v493
        %v528 = vunpack.c.l.b16 %v494
        %v529 = vunpack.c.l.b16 %v495
        %v530 = vunpack.c.l.b16 %v496
        %v531 = vunpack.c.l.b16 %v497
        %v532 = vunpack.c.l.b16 %v498
        %v533 = vunpack.c.l.b16 %v499
        %v534 = vunpack.c.l.b16 %v500
        %v535 = vunpack.c.l.b16 %v501
        %v536 = vunpack.c.l.b16 %v502
        %v537 = vunpack.c.l.b16 %v503
        %v538 = vunpack.c.l.b16 %v504
        %v539 = vpack.c.b16 %v524, %v523
        %v540 = vpack.c.b16 %v526, %v525
        %v541 = vpack.c.b16 %v528, %v527
        %v542 = vpack.c.b16 %v530, %v529
        %v543 = vpack.c.b16 %v532, %v531
        %v544 = vpack.c.b16 %v534, %v533
        %v545 = vpack.c.b16 %v536, %v535
        %v546 = vpack.c.b16 %v538, %v537
        %555 = vmatprep.subr.bf16.mxu0 0
        %556 = vmatpush1.bf16.msra.mxu0 %v539
        %557 = vmatprep.subr.bf16.mxu0 0
        %558 = vmatpush1.bf16.msra.mxu0 %v540
        %559 = vmatprep.subr.bf16.mxu0 0
        %560 = vmatpush1.bf16.msra.mxu0 %v541
        %561 = vmatprep.subr.bf16.mxu0 0
        %562 = vmatpush1.bf16.msra.mxu0 %v542
        %563 = vmatprep.subr.bf16.mxu0 0
        %564 = vmatpush1.bf16.msra.mxu0 %v543
        %565 = vmatprep.subr.bf16.mxu0 0
        %566 = vmatpush1.bf16.msra.mxu0 %v544
        %567 = vmatprep.subr.bf16.mxu0 0
        %568 = vmatpush1.bf16.msra.mxu0 %v545
        %569 = vmatprep.subr.bf16.mxu0 0
        %570 = vmatpush1.bf16.msra.mxu0 %v546
        %571 = vmatprep.subr.bf16.mxu0 0
        %572 = vmatpush1.bf16.msra.mxu0 0
        %573 = vmatprep.subr.bf16.mxu0 0
        %574 = vmatpush1.bf16.msra.mxu0 0
        %575 = vmatprep.subr.bf16.mxu0 0
        %576 = vmatpush1.bf16.msra.mxu0 0
        %577 = vmatprep.subr.bf16.mxu0 0
        %578 = vmatpush1.bf16.msra.mxu0 0
        %579 = vmatprep.subr.bf16.mxu0 0
        %580 = vmatpush1.bf16.msra.mxu0 0
        %581 = vmatprep.subr.bf16.mxu0 0
        %582 = vmatpush1.bf16.msra.mxu0 0
        %583 = vmatprep.subr.bf16.mxu0 0
        %584 = vmatpush1.bf16.msra.mxu0 0
        %585 = vmatprep.subr.bf16.mxu0 0
        %586 = vmatpush1.bf16.msra.mxu0 0
        %587 = vmatprep.mubr.bf16.mxu0 0
        %588 = vmatmul.mubr.bf16.gmra.mrb[0].mxu0 %v505
        %v589 = vpop.f32.mrb[0].mxu0
        %v590 = vadd.f32 %v506, %v589
        %v591 = vpop.f32.mrb[0].mxu0
        %v592 = vpop.f32.mrb[0].mxu0
        %v593 = vpop.f32.mrb[0].mxu0
        %594 = vdwg.mxu0
        %v595 = vmax.f32 %v590, 0.0
        %v596 = vld [vmem:[#allocation5 + $0x190] sm:$0xff]
        %v597 = vld [vmem:[#allocation5 + $0x198] sm:$0xff]
        %v598 = vld [vmem:[#allocation5 + $0x1a0] sm:$0xff]
        %v599 = vld [vmem:[#allocation5 + $0x1a8] sm:$0xff]
        %v600 = vld [vmem:[#allocation5 + $0x1b0] sm:$0xff]
        %v601 = vld [vmem:[#allocation5 + $0x1b8] sm:$0xff]
        %v602 = vld [vmem:[#allocation5 + $0x1c0] sm:$0xff]
        %v603 = vld [vmem:[#allocation5 + $0x1c8] sm:$0xff]
        %v604 = vld [vmem:[#allocation5 + $0x1d0] sm:$0xff]
        %v605 = vld [vmem:[#allocation5 + $0x1d8] sm:$0xff]
        %v606 = vld [vmem:[#allocation5 + $0x1e0] sm:$0xff]
        %v607 = vld [vmem:[#allocation5 + $0x1e8] sm:$0xff]
        %v608 = vld [vmem:[#allocation5 + $0x1f0] sm:$0xff]
        %v609 = vld [vmem:[#allocation5 + $0x1f8] sm:$0xff]
        %v610 = vld [vmem:[#allocation5 + $0x200] sm:$0xff]
        %v611 = vld [vmem:[#allocation5 + $0x208] sm:$0xff]
        %v612 = vpack.c.bf16 %v595, %v595
        %s613 = scalar_lea.vmem [#allocation7], 64
        %v614 = vld [vmem:[%s613] ss:$8 sm:$0x3]
        %v616 = vlaneseq
        %v617 = vshrl.u32 %v616, 7
        %v618 = vsub.s32 0, %v617
        %v619 = vrot.slane %v614, %v618
        %v620 = vlaneseq
        %v621 = vshrl.u32 %v620, 7
        %v622 = vsub.s32 1, %v621
        %v623 = vrot.slane %v614, %v622
        %v642 = vunpack.c.l.b16 %v596
        %v643 = vunpack.c.h.b16 %v596
        %v644 = vunpack.c.l.b16 %v597
        %v645 = vunpack.c.h.b16 %v597
        %v646 = vunpack.c.l.b16 %v598
        %v647 = vunpack.c.h.b16 %v598
        %v648 = vunpack.c.l.b16 %v599
        %v649 = vunpack.c.h.b16 %v599
        %v650 = vunpack.c.l.b16 %v600
        %v651 = vunpack.c.h.b16 %v600
        %v652 = vunpack.c.l.b16 %v601
        %v653 = vunpack.c.h.b16 %v601
        %v654 = vunpack.c.l.b16 %v602
        %v655 = vunpack.c.h.b16 %v602
        %v656 = vunpack.c.l.b16 %v603
        %v657 = vunpack.c.h.b16 %v603
        %v658 = vunpack.c.l.b16 %v604
        %v659 = vunpack.c.h.b16 %v604
        %v660 = vunpack.c.l.b16 %v605
        %v661 = vunpack.c.h.b16 %v605
        %v662 = vunpack.c.l.b16 %v606
        %v663 = vunpack.c.h.b16 %v606
        %v664 = vunpack.c.l.b16 %v607
        %v665 = vunpack.c.h.b16 %v607
        %v666 = vunpack.c.l.b16 %v608
        %v667 = vunpack.c.h.b16 %v608
        %v668 = vunpack.c.l.b16 %v609
        %v669 = vunpack.c.h.b16 %v609
        %v670 = vunpack.c.l.b16 %v610
        %v671 = vunpack.c.h.b16 %v610
        %v672 = vunpack.c.l.b16 %v611
        %v673 = vunpack.c.h.b16 %v611
        %v674 = vpack.c.b16 %v644, %v642
        %v675 = vpack.c.b16 %v645, %v643
        %v676 = vpack.c.b16 %v648, %v646
        %v677 = vpack.c.b16 %v649, %v647
        %v678 = vpack.c.b16 %v652, %v650
        %v679 = vpack.c.b16 %v653, %v651
        %v680 = vpack.c.b16 %v656, %v654
        %v681 = vpack.c.b16 %v657, %v655
        %v682 = vpack.c.b16 %v660, %v658
        %v683 = vpack.c.b16 %v661, %v659
        %v684 = vpack.c.b16 %v664, %v662
        %v685 = vpack.c.b16 %v665, %v663
        %v686 = vpack.c.b16 %v668, %v666
        %v687 = vpack.c.b16 %v669, %v667
        %v688 = vpack.c.b16 %v672, %v670
        %v689 = vpack.c.b16 %v673, %v671
        %706 = vmatprep.subr.bf16.mxu0 %v675
        %707 = vmatpush1.bf16.msra.mxu0 %v674
        %708 = vmatprep.subr.bf16.mxu0 %v677
        %709 = vmatpush1.bf16.msra.mxu0 %v676
        %710 = vmatprep.subr.bf16.mxu0 %v679
        %711 = vmatpush1.bf16.msra.mxu0 %v678
        %712 = vmatprep.subr.bf16.mxu0 %v681
        %713 = vmatpush1.bf16.msra.mxu0 %v680
        %714 = vmatprep.subr.bf16.mxu0 %v683
        %715 = vmatpush1.bf16.msra.mxu0 %v682
        %716 = vmatprep.subr.bf16.mxu0 %v685
        %717 = vmatpush1.bf16.msra.mxu0 %v684
        %718 = vmatprep.subr.bf16.mxu0 %v687
        %719 = vmatpush1.bf16.msra.mxu0 %v686
        %720 = vmatprep.subr.bf16.mxu0 %v689
        %721 = vmatpush1.bf16.msra.mxu0 %v688
        %722 = vmatprep.subr.bf16.mxu0 0
        %723 = vmatpush1.bf16.msra.mxu0 0
        %724 = vmatprep.subr.bf16.mxu0 0
        %725 = vmatpush1.bf16.msra.mxu0 0
        %726 = vmatprep.subr.bf16.mxu0 0
        %727 = vmatpush1.bf16.msra.mxu0 0
        %728 = vmatprep.subr.bf16.mxu0 0
        %729 = vmatpush1.bf16.msra.mxu0 0
        %730 = vmatprep.subr.bf16.mxu0 0
        %731 = vmatpush1.bf16.msra.mxu0 0
        %732 = vmatprep.subr.bf16.mxu0 0
        %733 = vmatpush1.bf16.msra.mxu0 0
        %734 = vmatprep.subr.bf16.mxu0 0
        %735 = vmatpush1.bf16.msra.mxu0 0
        %736 = vmatprep.subr.bf16.mxu0 0
        %737 = vmatpush1.bf16.msra.mxu0 0
        %738 = vmatprep.mubr.bf16.mxu0 0
        %739 = vmatmul.mubr.bf16.gmra.mrb[0].mxu0 %v612
        %v740 = vpop.f32.mrb[0].mxu0
        %v741 = vadd.f32 %v619, %v740
        %v742 = vpop.f32.mrb[0].mxu0
        %v743 = vadd.f32 %v623, %v742
        %v744 = vpop.f32.mrb[0].mxu0
        %v745 = vpop.f32.mrb[0].mxu0
        %746 = vdwg.mxu0
        %v747 = vmax.f32 %v741, 0.0
        %v748 = vmax.f32 %v743, 0.0
        %v749 = vld [vmem:[#allocation5 + $0x210] sm:$0xff]
        %v750 = vld [vmem:[#allocation5 + $0x218] sm:$0xff]
        %v751 = vld [vmem:[#allocation5 + $0x220] sm:$0xff]
        %v752 = vld [vmem:[#allocation5 + $0x228] sm:$0xff]
        %v753 = vld [vmem:[#allocation5 + $0x230] sm:$0xff]
        %v754 = vld [vmem:[#allocation5 + $0x238] sm:$0xff]
        %v755 = vld [vmem:[#allocation5 + $0x240] sm:$0xff]
        %v756 = vld [vmem:[#allocation5 + $0x248] sm:$0xff]
        %v757 = vld [vmem:[#allocation5 + $0x250] sm:$0xff]
        %v758 = vld [vmem:[#allocation5 + $0x258] sm:$0xff]
        %v759 = vld [vmem:[#allocation5 + $0x260] sm:$0xff]
        %v760 = vld [vmem:[#allocation5 + $0x268] sm:$0xff]
        %v761 = vld [vmem:[#allocation5 + $0x270] sm:$0xff]
        %v762 = vld [vmem:[#allocation5 + $0x278] sm:$0xff]
        %v763 = vld [vmem:[#allocation5 + $0x280] sm:$0xff]
        %v764 = vld [vmem:[#allocation5 + $0x288] sm:$0xff]
        %v765 = vld [vmem:[#allocation5 + $0x290] sm:$0xff]
        %v766 = vld [vmem:[#allocation5 + $0x298] sm:$0xff]
        %v767 = vld [vmem:[#allocation5 + $0x2a0] sm:$0xff]
        %v768 = vld [vmem:[#allocation5 + $0x2a8] sm:$0xff]
        %v769 = vld [vmem:[#allocation5 + $0x2b0] sm:$0xff]
        %v770 = vld [vmem:[#allocation5 + $0x2b8] sm:$0xff]
        %v771 = vld [vmem:[#allocation5 + $0x2c0] sm:$0xff]
        %v772 = vld [vmem:[#allocation5 + $0x2c8] sm:$0xff]
        %v773 = vld [vmem:[#allocation5 + $0x2d0] sm:$0xff]
        %v774 = vld [vmem:[#allocation5 + $0x2d8] sm:$0xff]
        %v775 = vld [vmem:[#allocation5 + $0x2e0] sm:$0xff]
        %v776 = vld [vmem:[#allocation5 + $0x2e8] sm:$0xff]
        %v777 = vld [vmem:[#allocation5 + $0x2f0] sm:$0xff]
        %v778 = vld [vmem:[#allocation5 + $0x2f8] sm:$0xff]
        %v779 = vld [vmem:[#allocation5 + $0x300] sm:$0xff]
        %v780 = vld [vmem:[#allocation5 + $0x308] sm:$0xff]
        %v781 = vpack.c.bf16 %v747, %v747
        %v782 = vpack.c.bf16 %v748, %v748
        %s783 = scalar_lea.vmem [#allocation7], 80
        %v784 = vld [vmem:[%s783] ss:$8 sm:$0x3]
        %v786 = vlaneseq
        %v787 = vshrl.u32 %v786, 7
        %v788 = vsub.s32 0, %v787
        %v789 = vrot.slane %v784, %v788
        %v790 = vlaneseq
        %v791 = vshrl.u32 %v790, 7
        %v792 = vsub.s32 1, %v791
        %v793 = vrot.slane %v784, %v792
        %v828 = vunpack.c.l.b16 %v749
        %v829 = vunpack.c.h.b16 %v749
        %v830 = vunpack.c.l.b16 %v750
        %v831 = vunpack.c.h.b16 %v750
        %v832 = vunpack.c.l.b16 %v751
        %v833 = vunpack.c.h.b16 %v751
        %v834 = vunpack.c.l.b16 %v752
        %v835 = vunpack.c.h.b16 %v752
        %v836 = vunpack.c.l.b16 %v753
        %v837 = vunpack.c.h.b16 %v753
        %v838 = vunpack.c.l.b16 %v754
        %v839 = vunpack.c.h.b16 %v754
        %v840 = vunpack.c.l.b16 %v755
        %v841 = vunpack.c.h.b16 %v755
        %v842 = vunpack.c.l.b16 %v756
        %v843 = vunpack.c.h.b16 %v756
        %v844 = vunpack.c.l.b16 %v757
        %v845 = vunpack.c.h.b16 %v757
        %v846 = vunpack.c.l.b16 %v758
        %v847 = vunpack.c.h.b16 %v758
        %v848 = vunpack.c.l.b16 %v759
        %v849 = vunpack.c.h.b16 %v759
        %v850 = vunpack.c.l.b16 %v760
        %v851 = vunpack.c.h.b16 %v760
        %v852 = vunpack.c.l.b16 %v761
        %v853 = vunpack.c.h.b16 %v761
        %v854 = vunpack.c.l.b16 %v762
        %v855 = vunpack.c.h.b16 %v762
        %v856 = vunpack.c.l.b16 %v763
        %v857 = vunpack.c.h.b16 %v763
        %v858 = vunpack.c.l.b16 %v764
        %v859 = vunpack.c.h.b16 %v764
        %v860 = vunpack.c.l.b16 %v765
        %v861 = vunpack.c.h.b16 %v765
        %v862 = vunpack.c.l.b16 %v766
        %v863 = vunpack.c.h.b16 %v766
        %v864 = vunpack.c.l.b16 %v767
        %v865 = vunpack.c.h.b16 %v767
        %v866 = vunpack.c.l.b16 %v768
        %v867 = vunpack.c.h.b16 %v768
        %v868 = vunpack.c.l.b16 %v769
        %v869 = vunpack.c.h.b16 %v769
        %v870 = vunpack.c.l.b16 %v770
        %v871 = vunpack.c.h.b16 %v770
        %v872 = vunpack.c.l.b16 %v771
        %v873 = vunpack.c.h.b16 %v771
        %v874 = vunpack.c.l.b16 %v772
        %v875 = vunpack.c.h.b16 %v772
        %v876 = vunpack.c.l.b16 %v773
        %v877 = vunpack.c.h.b16 %v773
        %v878 = vunpack.c.l.b16 %v774
        %v879 = vunpack.c.h.b16 %v774
        %v880 = vunpack.c.l.b16 %v775
        %v881 = vunpack.c.h.b16 %v775
        %v882 = vunpack.c.l.b16 %v776
        %v883 = vunpack.c.h.b16 %v776
        %v884 = vunpack.c.l.b16 %v777
        %v885 = vunpack.c.h.b16 %v777
        %v886 = vunpack.c.l.b16 %v778
        %v887 = vunpack.c.h.b16 %v778
        %v888 = vunpack.c.l.b16 %v779
        %v889 = vunpack.c.h.b16 %v779
        %v890 = vunpack.c.l.b16 %v780
        %v891 = vunpack.c.h.b16 %v780
        %v892 = vpack.c.b16 %v830, %v828
        %v893 = vpack.c.b16 %v831, %v829
        %v894 = vpack.c.b16 %v834, %v832
        %v895 = vpack.c.b16 %v835, %v833
        %v896 = vpack.c.b16 %v838, %v836
        %v897 = vpack.c.b16 %v839, %v837
        %v898 = vpack.c.b16 %v842, %v840
        %v899 = vpack.c.b16 %v843, %v841
        %v900 = vpack.c.b16 %v846, %v844
        %v901 = vpack.c.b16 %v847, %v845
        %v902 = vpack.c.b16 %v850, %v848
        %v903 = vpack.c.b16 %v851, %v849
        %v904 = vpack.c.b16 %v854, %v852
        %v905 = vpack.c.b16 %v855, %v853
        %v906 = vpack.c.b16 %v858, %v856
        %v907 = vpack.c.b16 %v859, %v857
        %v908 = vpack.c.b16 %v862, %v860
        %v909 = vpack.c.b16 %v863, %v861
        %v910 = vpack.c.b16 %v866, %v864
        %v911 = vpack.c.b16 %v867, %v865
        %v912 = vpack.c.b16 %v870, %v868
        %v913 = vpack.c.b16 %v871, %v869
        %v914 = vpack.c.b16 %v874, %v872
        %v915 = vpack.c.b16 %v875, %v873
        %v916 = vpack.c.b16 %v878, %v876
        %v917 = vpack.c.b16 %v879, %v877
        %v918 = vpack.c.b16 %v882, %v880
        %v919 = vpack.c.b16 %v883, %v881
        %v920 = vpack.c.b16 %v886, %v884
        %v921 = vpack.c.b16 %v887, %v885
        %v922 = vpack.c.b16 %v890, %v888
        %v923 = vpack.c.b16 %v891, %v889
        %956 = vmatprep.subr.bf16.mxu0 %v893
        %957 = vmatpush1.bf16.msra.mxu0 %v892
        %958 = vmatprep.subr.bf16.mxu0 %v895
        %959 = vmatpush1.bf16.msra.mxu0 %v894
        %960 = vmatprep.subr.bf16.mxu0 %v897
        %961 = vmatpush1.bf16.msra.mxu0 %v896
        %962 = vmatprep.subr.bf16.mxu0 %v899
        %963 = vmatpush1.bf16.msra.mxu0 %v898
        %964 = vmatprep.subr.bf16.mxu0 %v901
        %965 = vmatpush1.bf16.msra.mxu0 %v900
        %966 = vmatprep.subr.bf16.mxu0 %v903
        %967 = vmatpush1.bf16.msra.mxu0 %v902
        %968 = vmatprep.subr.bf16.mxu0 %v905
        %969 = vmatpush1.bf16.msra.mxu0 %v904
        %970 = vmatprep.subr.bf16.mxu0 %v907
        %971 = vmatpush1.bf16.msra.mxu0 %v906
        %972 = vmatprep.subr.bf16.mxu0 %v909
        %973 = vmatpush1.bf16.msra.mxu0 %v908
        %974 = vmatprep.subr.bf16.mxu0 %v911
        %975 = vmatpush1.bf16.msra.mxu0 %v910
        %976 = vmatprep.subr.bf16.mxu0 %v913
        %977 = vmatpush1.bf16.msra.mxu0 %v912
        %978 = vmatprep.subr.bf16.mxu0 %v915
        %979 = vmatpush1.bf16.msra.mxu0 %v914
        %980 = vmatprep.subr.bf16.mxu0 %v917
        %981 = vmatpush1.bf16.msra.mxu0 %v916
        %982 = vmatprep.subr.bf16.mxu0 %v919
        %983 = vmatpush1.bf16.msra.mxu0 %v918
        %984 = vmatprep.subr.bf16.mxu0 %v921
        %985 = vmatpush1.bf16.msra.mxu0 %v920
        %986 = vmatprep.subr.bf16.mxu0 %v923
        %987 = vmatpush1.bf16.msra.mxu0 %v922
        %988 = vmatprep.mubr.bf16.mxu0 %v782
        %989 = vmatmul.mubr.bf16.gmra.mrb[0].mxu0 %v781
        %v990 = vpop.f32.mrb[0].mxu0
        %v991 = vadd.f32 %v789, %v990
        %v992 = vpop.f32.mrb[0].mxu0
        %v993 = vadd.f32 %v793, %v992
        %v994 = vpop.f32.mrb[0].mxu0
        %v995 = vpop.f32.mrb[0].mxu0
        %996 = vdwg.mxu0
        %v997 = vmax.f32 %v991, 0.0
        %v998 = vmax.f32 %v993, 0.0
        %v999 = vld [vmem:[#allocation5 + $0x310] sm:$0xff]
        %v1000 = vld [vmem:[#allocation5 + $0x318] sm:$0xff]
        %v1001 = vld [vmem:[#allocation5 + $0x320] sm:$0xff]
        %v1002 = vld [vmem:[#allocation5 + $0x328] sm:$0xff]
        %v1003 = vld [vmem:[#allocation5 + $0x330] sm:$0xff]
        %v1004 = vld [vmem:[#allocation5 + $0x338] sm:$0xff]
        %v1005 = vld [vmem:[#allocation5 + $0x340] sm:$0xff]
        %v1006 = vld [vmem:[#allocation5 + $0x348] sm:$0xff]
        %v1007 = vld [vmem:[#allocation5 + $0x350] sm:$0xff]
        %v1008 = vld [vmem:[#allocation5 + $0x358] sm:$0xff]
        %v1009 = vld [vmem:[#allocation5 + $0x360] sm:$0xff]
        %v1010 = vld [vmem:[#allocation5 + $0x368] sm:$0xff]
        %v1011 = vld [vmem:[#allocation5 + $0x370] sm:$0xff]
        %v1012 = vld [vmem:[#allocation5 + $0x378] sm:$0xff]
        %v1013 = vld [vmem:[#allocation5 + $0x380] sm:$0xff]
        %v1014 = vld [vmem:[#allocation5 + $0x388] sm:$0xff]
        %v1015 = vld [vmem:[#allocation5 + $0x390] sm:$0xff]
        %v1016 = vld [vmem:[#allocation5 + $0x398] sm:$0xff]
        %v1017 = vld [vmem:[#allocation5 + $0x3a0] sm:$0xff]
        %v1018 = vld [vmem:[#allocation5 + $0x3a8] sm:$0xff]
        %v1019 = vld [vmem:[#allocation5 + $0x3b0] sm:$0xff]
        %v1020 = vld [vmem:[#allocation5 + $0x3b8] sm:$0xff]
        %v1021 = vld [vmem:[#allocation5 + $0x3c0] sm:$0xff]
        %v1022 = vld [vmem:[#allocation5 + $0x3c8] sm:$0xff]
        %v1023 = vld [vmem:[#allocation5 + $0x3d0] sm:$0xff]
        %v1024 = vld [vmem:[#allocation5 + $0x3d8] sm:$0xff]
        %v1025 = vld [vmem:[#allocation5 + $0x3e0] sm:$0xff]
        %v1026 = vld [vmem:[#allocation5 + $0x3e8] sm:$0xff]
        %v1027 = vld [vmem:[#allocation5 + $0x3f0] sm:$0xff]
        %v1028 = vld [vmem:[#allocation5 + $0x3f8] sm:$0xff]
        %v1029 = vld [vmem:[#allocation5 + $0x400] sm:$0xff]
        %v1030 = vld [vmem:[#allocation5 + $0x408] sm:$0xff]
        %v1031 = vpack.c.bf16 %v997, %v997
        %v1032 = vpack.c.bf16 %v998, %v998
        %s1033 = scalar_lea.vmem [#allocation7], 96
        %v1034 = vld [vmem:[%s1033] ss:$8 sm:$0x3]
        %v1036 = vlaneseq
        %v1037 = vshrl.u32 %v1036, 7
        %v1038 = vsub.s32 0, %v1037
        %v1039 = vrot.slane %v1034, %v1038
        %v1040 = vlaneseq
        %v1041 = vshrl.u32 %v1040, 7
        %v1042 = vsub.s32 1, %v1041
        %v1043 = vrot.slane %v1034, %v1042
        %v1078 = vunpack.c.l.b16 %v999
        %v1079 = vunpack.c.h.b16 %v999
        %v1080 = vunpack.c.l.b16 %v1000
        %v1081 = vunpack.c.h.b16 %v1000
        %v1082 = vunpack.c.l.b16 %v1001
        %v1083 = vunpack.c.h.b16 %v1001
        %v1084 = vunpack.c.l.b16 %v1002
        %v1085 = vunpack.c.h.b16 %v1002
        %v1086 = vunpack.c.l.b16 %v1003
        %v1087 = vunpack.c.h.b16 %v1003
        %v1088 = vunpack.c.l.b16 %v1004
        %v1089 = vunpack.c.h.b16 %v1004
        %v1090 = vunpack.c.l.b16 %v1005
        %v1091 = vunpack.c.h.b16 %v1005
        %v1092 = vunpack.c.l.b16 %v1006
        %v1093 = vunpack.c.h.b16 %v1006
        %v1094 = vunpack.c.l.b16 %v1007
        %v1095 = vunpack.c.h.b16 %v1007
        %v1096 = vunpack.c.l.b16 %v1008
        %v1097 = vunpack.c.h.b16 %v1008
        %v1098 = vunpack.c.l.b16 %v1009
        %v1099 = vunpack.c.h.b16 %v1009
        %v1100 = vunpack.c.l.b16 %v1010
        %v1101 = vunpack.c.h.b16 %v1010
        %v1102 = vunpack.c.l.b16 %v1011
        %v1103 = vunpack.c.h.b16 %v1011
        %v1104 = vunpack.c.l.b16 %v1012
        %v1105 = vunpack.c.h.b16 %v1012
        %v1106 = vunpack.c.l.b16 %v1013
        %v1107 = vunpack.c.h.b16 %v1013
        %v1108 = vunpack.c.l.b16 %v1014
        %v1109 = vunpack.c.h.b16 %v1014
        %v1110 = vunpack.c.l.b16 %v1015
        %v1111 = vunpack.c.h.b16 %v1015
        %v1112 = vunpack.c.l.b16 %v1016
        %v1113 = vunpack.c.h.b16 %v1016
        %v1114 = vunpack.c.l.b16 %v1017
        %v1115 = vunpack.c.h.b16 %v1017
        %v1116 = vunpack.c.l.b16 %v1018
        %v1117 = vunpack.c.h.b16 %v1018
        %v1118 = vunpack.c.l.b16 %v1019
        %v1119 = vunpack.c.h.b16 %v1019
        %v1120 = vunpack.c.l.b16 %v1020
        %v1121 = vunpack.c.h.b16 %v1020
        %v1122 = vunpack.c.l.b16 %v1021
        %v1123 = vunpack.c.h.b16 %v1021
        %v1124 = vunpack.c.l.b16 %v1022
        %v1125 = vunpack.c.h.b16 %v1022
        %v1126 = vunpack.c.l.b16 %v1023
        %v1127 = vunpack.c.h.b16 %v1023
        %v1128 = vunpack.c.l.b16 %v1024
        %v1129 = vunpack.c.h.b16 %v1024
        %v1130 = vunpack.c.l.b16 %v1025
        %v1131 = vunpack.c.h.b16 %v1025
        %v1132 = vunpack.c.l.b16 %v1026
        %v1133 = vunpack.c.h.b16 %v1026
        %v1134 = vunpack.c.l.b16 %v1027
        %v1135 = vunpack.c.h.b16 %v1027
        %v1136 = vunpack.c.l.b16 %v1028
        %v1137 = vunpack.c.h.b16 %v1028
        %v1138 = vunpack.c.l.b16 %v1029
        %v1139 = vunpack.c.h.b16 %v1029
        %v1140 = vunpack.c.l.b16 %v1030
        %v1141 = vunpack.c.h.b16 %v1030
        %v1142 = vpack.c.b16 %v1080, %v1078
        %v1143 = vpack.c.b16 %v1081, %v1079
        %v1144 = vpack.c.b16 %v1084, %v1082
        %v1145 = vpack.c.b16 %v1085, %v1083
        %v1146 = vpack.c.b16 %v1088, %v1086
        %v1147 = vpack.c.b16 %v1089, %v1087
        %v1148 = vpack.c.b16 %v1092, %v1090
        %v1149 = vpack.c.b16 %v1093, %v1091
        %v1150 = vpack.c.b16 %v1096, %v1094
        %v1151 = vpack.c.b16 %v1097, %v1095
        %v1152 = vpack.c.b16 %v1100, %v1098
        %v1153 = vpack.c.b16 %v1101, %v1099
        %v1154 = vpack.c.b16 %v1104, %v1102
        %v1155 = vpack.c.b16 %v1105, %v1103
        %v1156 = vpack.c.b16 %v1108, %v1106
        %v1157 = vpack.c.b16 %v1109, %v1107
        %v1158 = vpack.c.b16 %v1112, %v1110
        %v1159 = vpack.c.b16 %v1113, %v1111
        %v1160 = vpack.c.b16 %v1116, %v1114
        %v1161 = vpack.c.b16 %v1117, %v1115
        %v1162 = vpack.c.b16 %v1120, %v1118
        %v1163 = vpack.c.b16 %v1121, %v1119
        %v1164 = vpack.c.b16 %v1124, %v1122
        %v1165 = vpack.c.b16 %v1125, %v1123
        %v1166 = vpack.c.b16 %v1128, %v1126
        %v1167 = vpack.c.b16 %v1129, %v1127
        %v1168 = vpack.c.b16 %v1132, %v1130
        %v1169 = vpack.c.b16 %v1133, %v1131
        %v1170 = vpack.c.b16 %v1136, %v1134
        %v1171 = vpack.c.b16 %v1137, %v1135
        %v1172 = vpack.c.b16 %v1140, %v1138
        %v1173 = vpack.c.b16 %v1141, %v1139
        %1206 = vmatprep.subr.bf16.mxu0 %v1143
        %1207 = vmatpush1.bf16.msra.mxu0 %v1142
        %1208 = vmatprep.subr.bf16.mxu0 %v1145
        %1209 = vmatpush1.bf16.msra.mxu0 %v1144
        %1210 = vmatprep.subr.bf16.mxu0 %v1147
        %1211 = vmatpush1.bf16.msra.mxu0 %v1146
        %1212 = vmatprep.subr.bf16.mxu0 %v1149
        %1213 = vmatpush1.bf16.msra.mxu0 %v1148
        %1214 = vmatprep.subr.bf16.mxu0 %v1151
        %1215 = vmatpush1.bf16.msra.mxu0 %v1150
        %1216 = vmatprep.subr.bf16.mxu0 %v1153
        %1217 = vmatpush1.bf16.msra.mxu0 %v1152
        %1218 = vmatprep.subr.bf16.mxu0 %v1155
        %1219 = vmatpush1.bf16.msra.mxu0 %v1154
        %1220 = vmatprep.subr.bf16.mxu0 %v1157
        %1221 = vmatpush1.bf16.msra.mxu0 %v1156
        %1222 = vmatprep.subr.bf16.mxu0 %v1159
        %1223 = vmatpush1.bf16.msra.mxu0 %v1158
        %1224 = vmatprep.subr.bf16.mxu0 %v1161
        %1225 = vmatpush1.bf16.msra.mxu0 %v1160
        %1226 = vmatprep.subr.bf16.mxu0 %v1163
        %1227 = vmatpush1.bf16.msra.mxu0 %v1162
        %1228 = vmatprep.subr.bf16.mxu0 %v1165
        %1229 = vmatpush1.bf16.msra.mxu0 %v1164
        %1230 = vmatprep.subr.bf16.mxu0 %v1167
        %1231 = vmatpush1.bf16.msra.mxu0 %v1166
        %1232 = vmatprep.subr.bf16.mxu0 %v1169
        %1233 = vmatpush1.bf16.msra.mxu0 %v1168
        %1234 = vmatprep.subr.bf16.mxu0 %v1171
        %1235 = vmatpush1.bf16.msra.mxu0 %v1170
        %1236 = vmatprep.subr.bf16.mxu0 %v1173
        %1237 = vmatpush1.bf16.msra.mxu0 %v1172
        %1238 = vmatprep.mubr.bf16.mxu0 %v1032
        %1239 = vmatmul.mubr.bf16.gmra.mrb[0].mxu0 %v1031
        %v1240 = vpop.f32.mrb[0].mxu0
        %v1241 = vadd.f32 %v1039, %v1240
        %v1242 = vpop.f32.mrb[0].mxu0
        %v1243 = vadd.f32 %v1043, %v1242
        %v1244 = vpop.f32.mrb[0].mxu0
        %v1245 = vpop.f32.mrb[0].mxu0
        %1246 = vdwg.mxu0
        %v1247 = vmax.f32 %v1241, 0.0
        %v1248 = vmax.f32 %v1243, 0.0
        %v1249 = vld [vmem:[#allocation5 + $0x410] sm:$0xff]
        %v1250 = vld [vmem:[#allocation5 + $0x418] sm:$0xff]
        %v1251 = vld [vmem:[#allocation5 + $0x420] sm:$0xff]
        %v1252 = vld [vmem:[#allocation5 + $0x428] sm:$0xff]
        %v1253 = vld [vmem:[#allocation5 + $0x430] sm:$0xff]
        %v1254 = vld [vmem:[#allocation5 + $0x438] sm:$0xff]
        %v1255 = vld [vmem:[#allocation5 + $0x440] sm:$0xff]
        %v1256 = vld [vmem:[#allocation5 + $0x448] sm:$0xff]
        %v1257 = vld [vmem:[#allocation5 + $0x450] sm:$0xff]
        %v1258 = vld [vmem:[#allocation5 + $0x458] sm:$0xff]
        %v1259 = vld [vmem:[#allocation5 + $0x460] sm:$0xff]
        %v1260 = vld [vmem:[#allocation5 + $0x468] sm:$0xff]
        %v1261 = vld [vmem:[#allocation5 + $0x470] sm:$0xff]
        %v1262 = vld [vmem:[#allocation5 + $0x478] sm:$0xff]
        %v1263 = vld [vmem:[#allocation5 + $0x480] sm:$0xff]
        %v1264 = vld [vmem:[#allocation5 + $0x488] sm:$0xff]
        %v1265 = vld [vmem:[#allocation5 + $0x490] sm:$0xff]
        %v1266 = vld [vmem:[#allocation5 + $0x498] sm:$0xff]
        %v1267 = vld [vmem:[#allocation5 + $0x4a0] sm:$0xff]
        %v1268 = vld [vmem:[#allocation5 + $0x4a8] sm:$0xff]
        %v1269 = vld [vmem:[#allocation5 + $0x4b0] sm:$0xff]
        %v1270 = vld [vmem:[#allocation5 + $0x4b8] sm:$0xff]
        %v1271 = vld [vmem:[#allocation5 + $0x4c0] sm:$0xff]
        %v1272 = vld [vmem:[#allocation5 + $0x4c8] sm:$0xff]
        %v1273 = vld [vmem:[#allocation5 + $0x4d0] sm:$0xff]
        %v1274 = vld [vmem:[#allocation5 + $0x4d8] sm:$0xff]
        %v1275 = vld [vmem:[#allocation5 + $0x4e0] sm:$0xff]
        %v1276 = vld [vmem:[#allocation5 + $0x4e8] sm:$0xff]
        %v1277 = vld [vmem:[#allocation5 + $0x4f0] sm:$0xff]
        %v1278 = vld [vmem:[#allocation5 + $0x4f8] sm:$0xff]
        %v1279 = vld [vmem:[#allocation5 + $0x500] sm:$0xff]
        %v1280 = vld [vmem:[#allocation5 + $0x508] sm:$0xff]
        %v1281 = vpack.c.bf16 %v1247, %v1247
        %v1282 = vpack.c.bf16 %v1248, %v1248
        %s1283 = scalar_lea.vmem [#allocation7], 112
        %v1284 = vld [vmem:[%s1283] ss:$8 sm:$0x3]
        %v1286 = vlaneseq
        %v1287 = vshrl.u32 %v1286, 7
        %v1288 = vsub.s32 0, %v1287
        %v1289 = vrot.slane %v1284, %v1288
        %v1290 = vlaneseq
        %v1291 = vshrl.u32 %v1290, 7
        %v1292 = vsub.s32 1, %v1291
        %v1293 = vrot.slane %v1284, %v1292
        %v1328 = vunpack.c.l.b16 %v1249
        %v1329 = vunpack.c.h.b16 %v1249
        %v1330 = vunpack.c.l.b16 %v1250
        %v1331 = vunpack.c.h.b16 %v1250
        %v1332 = vunpack.c.l.b16 %v1251
        %v1333 = vunpack.c.h.b16 %v1251
        %v1334 = vunpack.c.l.b16 %v1252
        %v1335 = vunpack.c.h.b16 %v1252
        %v1336 = vunpack.c.l.b16 %v1253
        %v1337 = vunpack.c.h.b16 %v1253
        %v1338 = vunpack.c.l.b16 %v1254
        %v1339 = vunpack.c.h.b16 %v1254
        %v1340 = vunpack.c.l.b16 %v1255
        %v1341 = vunpack.c.h.b16 %v1255
        %v1342 = vunpack.c.l.b16 %v1256
        %v1343 = vunpack.c.h.b16 %v1256
        %v1344 = vunpack.c.l.b16 %v1257
        %v1345 = vunpack.c.h.b16 %v1257
        %v1346 = vunpack.c.l.b16 %v1258
        %v1347 = vunpack.c.h.b16 %v1258
        %v1348 = vunpack.c.l.b16 %v1259
        %v1349 = vunpack.c.h.b16 %v1259
        %v1350 = vunpack.c.l.b16 %v1260
        %v1351 = vunpack.c.h.b16 %v1260
        %v1352 = vunpack.c.l.b16 %v1261
        %v1353 = vunpack.c.h.b16 %v1261
        %v1354 = vunpack.c.l.b16 %v1262
        %v1355 = vunpack.c.h.b16 %v1262
        %v1356 = vunpack.c.l.b16 %v1263
        %v1357 = vunpack.c.h.b16 %v1263
        %v1358 = vunpack.c.l.b16 %v1264
        %v1359 = vunpack.c.h.b16 %v1264
        %v1360 = vunpack.c.l.b16 %v1265
        %v1361 = vunpack.c.h.b16 %v1265
        %v1362 = vunpack.c.l.b16 %v1266
        %v1363 = vunpack.c.h.b16 %v1266
        %v1364 = vunpack.c.l.b16 %v1267
        %v1365 = vunpack.c.h.b16 %v1267
        %v1366 = vunpack.c.l.b16 %v1268
        %v1367 = vunpack.c.h.b16 %v1268
        %v1368 = vunpack.c.l.b16 %v1269
        %v1369 = vunpack.c.h.b16 %v1269
        %v1370 = vunpack.c.l.b16 %v1270
        %v1371 = vunpack.c.h.b16 %v1270
        %v1372 = vunpack.c.l.b16 %v1271
        %v1373 = vunpack.c.h.b16 %v1271
        %v1374 = vunpack.c.l.b16 %v1272
        %v1375 = vunpack.c.h.b16 %v1272
        %v1376 = vunpack.c.l.b16 %v1273
        %v1377 = vunpack.c.h.b16 %v1273
        %v1378 = vunpack.c.l.b16 %v1274
        %v1379 = vunpack.c.h.b16 %v1274
        %v1380 = vunpack.c.l.b16 %v1275
        %v1381 = vunpack.c.h.b16 %v1275
        %v1382 = vunpack.c.l.b16 %v1276
        %v1383 = vunpack.c.h.b16 %v1276
        %v1384 = vunpack.c.l.b16 %v1277
        %v1385 = vunpack.c.h.b16 %v1277
        %v1386 = vunpack.c.l.b16 %v1278
        %v1387 = vunpack.c.h.b16 %v1278
        %v1388 = vunpack.c.l.b16 %v1279
        %v1389 = vunpack.c.h.b16 %v1279
        %v1390 = vunpack.c.l.b16 %v1280
        %v1391 = vunpack.c.h.b16 %v1280
        %v1392 = vpack.c.b16 %v1330, %v1328
        %v1393 = vpack.c.b16 %v1331, %v1329
        %v1394 = vpack.c.b16 %v1334, %v1332
        %v1395 = vpack.c.b16 %v1335, %v1333
        %v1396 = vpack.c.b16 %v1338, %v1336
        %v1397 = vpack.c.b16 %v1339, %v1337
        %v1398 = vpack.c.b16 %v1342, %v1340
        %v1399 = vpack.c.b16 %v1343, %v1341
        %v1400 = vpack.c.b16 %v1346, %v1344
        %v1401 = vpack.c.b16 %v1347, %v1345
        %v1402 = vpack.c.b16 %v1350, %v1348
        %v1403 = vpack.c.b16 %v1351, %v1349
        %v1404 = vpack.c.b16 %v1354, %v1352
        %v1405 = vpack.c.b16 %v1355, %v1353
        %v1406 = vpack.c.b16 %v1358, %v1356
        %v1407 = vpack.c.b16 %v1359, %v1357
        %v1408 = vpack.c.b16 %v1362, %v1360
        %v1409 = vpack.c.b16 %v1363, %v1361
        %v1410 = vpack.c.b16 %v1366, %v1364
        %v1411 = vpack.c.b16 %v1367, %v1365
        %v1412 = vpack.c.b16 %v1370, %v1368
        %v1413 = vpack.c.b16 %v1371, %v1369
        %v1414 = vpack.c.b16 %v1374, %v1372
        %v1415 = vpack.c.b16 %v1375, %v1373
        %v1416 = vpack.c.b16 %v1378, %v1376
        %v1417 = vpack.c.b16 %v1379, %v1377
        %v1418 = vpack.c.b16 %v1382, %v1380
        %v1419 = vpack.c.b16 %v1383, %v1381
        %v1420 = vpack.c.b16 %v1386, %v1384
        %v1421 = vpack.c.b16 %v1387, %v1385
        %v1422 = vpack.c.b16 %v1390, %v1388
        %v1423 = vpack.c.b16 %v1391, %v1389
        %1456 = vmatprep.subr.bf16.mxu0 %v1393
        %1457 = vmatpush1.bf16.msra.mxu0 %v1392
        %1458 = vmatprep.subr.bf16.mxu0 %v1395
        %1459 = vmatpush1.bf16.msra.mxu0 %v1394
        %1460 = vmatprep.subr.bf16.mxu0 %v1397
        %1461 = vmatpush1.bf16.msra.mxu0 %v1396
        %1462 = vmatprep.subr.bf16.mxu0 %v1399
        %1463 = vmatpush1.bf16.msra.mxu0 %v1398
        %1464 = vmatprep.subr.bf16.mxu0 %v1401
        %1465 = vmatpush1.bf16.msra.mxu0 %v1400
        %1466 = vmatprep.subr.bf16.mxu0 %v1403
        %1467 = vmatpush1.bf16.msra.mxu0 %v1402
        %1468 = vmatprep.subr.bf16.mxu0 %v1405
        %1469 = vmatpush1.bf16.msra.mxu0 %v1404
        %1470 = vmatprep.subr.bf16.mxu0 %v1407
        %1471 = vmatpush1.bf16.msra.mxu0 %v1406
        %1472 = vmatprep.subr.bf16.mxu0 %v1409
        %1473 = vmatpush1.bf16.msra.mxu0 %v1408
        %1474 = vmatprep.subr.bf16.mxu0 %v1411
        %1475 = vmatpush1.bf16.msra.mxu0 %v1410
        %1476 = vmatprep.subr.bf16.mxu0 %v1413
        %1477 = vmatpush1.bf16.msra.mxu0 %v1412
        %1478 = vmatprep.subr.bf16.mxu0 %v1415
        %1479 = vmatpush1.bf16.msra.mxu0 %v1414
        %1480 = vmatprep.subr.bf16.mxu0 %v1417
        %1481 = vmatpush1.bf16.msra.mxu0 %v1416
        %1482 = vmatprep.subr.bf16.mxu0 %v1419
        %1483 = vmatpush1.bf16.msra.mxu0 %v1418
        %1484 = vmatprep.subr.bf16.mxu0 %v1421
        %1485 = vmatpush1.bf16.msra.mxu0 %v1420
        %1486 = vmatprep.subr.bf16.mxu0 %v1423
        %1487 = vmatpush1.bf16.msra.mxu0 %v1422
        %1488 = vmatprep.mubr.bf16.mxu0 %v1282
        %1489 = vmatmul.mubr.bf16.gmra.mrb[0].mxu0 %v1281
        %v1490 = vpop.f32.mrb[0].mxu0
        %v1491 = vadd.f32 %v1289, %v1490
        %v1492 = vpop.f32.mrb[0].mxu0
        %v1493 = vadd.f32 %v1293, %v1492
        %v1494 = vpop.f32.mrb[0].mxu0
        %v1495 = vpop.f32.mrb[0].mxu0
        %1496 = vdwg.mxu0
        %v1497 = vmax.f32 %v1491, 0.0
        %v1498 = vmax.f32 %v1493, 0.0
        %v1499 = vld [vmem:[#allocation5 + $0x510] sm:$0xf]
        %v1500 = vld [vmem:[#allocation5 + $0x518] sm:$0xf]
        %v1501 = vld [vmem:[#allocation5 + $0x520] sm:$0xf]
        %v1502 = vld [vmem:[#allocation5 + $0x528] sm:$0xf]
        %v1503 = vld [vmem:[#allocation5 + $0x530] sm:$0xf]
        %v1504 = vld [vmem:[#allocation5 + $0x538] sm:$0xf]
        %v1505 = vld [vmem:[#allocation5 + $0x540] sm:$0xf]
        %v1506 = vld [vmem:[#allocation5 + $0x548] sm:$0xf]
        %v1507 = vld [vmem:[#allocation5 + $0x550] sm:$0xf]
        %v1508 = vld [vmem:[#allocation5 + $0x558] sm:$0xf]
        %v1509 = vld [vmem:[#allocation5 + $0x560] sm:$0xf]
        %v1510 = vld [vmem:[#allocation5 + $0x568] sm:$0xf]
        %v1511 = vld [vmem:[#allocation5 + $0x570] sm:$0xf]
        %v1512 = vld [vmem:[#allocation5 + $0x578] sm:$0xf]
        %v1513 = vld [vmem:[#allocation5 + $0x580] sm:$0xf]
        %v1514 = vld [vmem:[#allocation5 + $0x588] sm:$0xf]
        %v1515 = vld [vmem:[#allocation5 + $0x590] sm:$0xf]
        %v1516 = vld [vmem:[#allocation5 + $0x598] sm:$0xf]
        %v1517 = vld [vmem:[#allocation5 + $0x5a0] sm:$0xf]
        %v1518 = vld [vmem:[#allocation5 + $0x5a8] sm:$0xf]
        %v1519 = vld [vmem:[#allocation5 + $0x5b0] sm:$0xf]
        %v1520 = vld [vmem:[#allocation5 + $0x5b8] sm:$0xf]
        %v1521 = vld [vmem:[#allocation5 + $0x5c0] sm:$0xf]
        %v1522 = vld [vmem:[#allocation5 + $0x5c8] sm:$0xf]
        %v1523 = vld [vmem:[#allocation5 + $0x5d0] sm:$0xf]
        %v1524 = vld [vmem:[#allocation5 + $0x5d8] sm:$0xf]
        %v1525 = vld [vmem:[#allocation5 + $0x5e0] sm:$0xf]
        %v1526 = vld [vmem:[#allocation5 + $0x5e8] sm:$0xf]
        %v1527 = vld [vmem:[#allocation5 + $0x5f0] sm:$0xf]
        %v1528 = vld [vmem:[#allocation5 + $0x5f8] sm:$0xf]
        %v1529 = vld [vmem:[#allocation5 + $0x600] sm:$0xf]
        %v1530 = vld [vmem:[#allocation5 + $0x608] sm:$0xf]
        %v1531 = vpack.c.bf16 %v1497, %v1497
        %v1532 = vpack.c.bf16 %v1498, %v1498
        %v1533 = vld [vmem:[#allocation7 + $0x80] ss:$0 sm:$0xff]
        %v1566 = vunpack.c.l.b16 %v1499
        %v1567 = vunpack.c.l.b16 %v1500
        %v1568 = vunpack.c.l.b16 %v1501
        %v1569 = vunpack.c.l.b16 %v1502
        %v1570 = vunpack.c.l.b16 %v1503
        %v1571 = vunpack.c.l.b16 %v1504
        %v1572 = vunpack.c.l.b16 %v1505
        %v1573 = vunpack.c.l.b16 %v1506
        %v1574 = vunpack.c.l.b16 %v1507
        %v1575 = vunpack.c.l.b16 %v1508
        %v1576 = vunpack.c.l.b16 %v1509
        %v1577 = vunpack.c.l.b16 %v1510
        %v1578 = vunpack.c.l.b16 %v1511
        %v1579 = vunpack.c.l.b16 %v1512
        %v1580 = vunpack.c.l.b16 %v1513
        %v1581 = vunpack.c.l.b16 %v1514
        %v1582 = vunpack.c.l.b16 %v1515
        %v1583 = vunpack.c.l.b16 %v1516
        %v1584 = vunpack.c.l.b16 %v1517
        %v1585 = vunpack.c.l.b16 %v1518
        %v1586 = vunpack.c.l.b16 %v1519
        %v1587 = vunpack.c.l.b16 %v1520
        %v1588 = vunpack.c.l.b16 %v1521
        %v1589 = vunpack.c.l.b16 %v1522
        %v1590 = vunpack.c.l.b16 %v1523
        %v1591 = vunpack.c.l.b16 %v1524
        %v1592 = vunpack.c.l.b16 %v1525
        %v1593 = vunpack.c.l.b16 %v1526
        %v1594 = vunpack.c.l.b16 %v1527
        %v1595 = vunpack.c.l.b16 %v1528
        %v1596 = vunpack.c.l.b16 %v1529
        %v1597 = vunpack.c.l.b16 %v1530
        %v1598 = vpack.c.b16 %v1567, %v1566
        %v1599 = vpack.c.b16 %v1569, %v1568
        %v1600 = vpack.c.b16 %v1571, %v1570
        %v1601 = vpack.c.b16 %v1573, %v1572
        %v1602 = vpack.c.b16 %v1575, %v1574
        %v1603 = vpack.c.b16 %v1577, %v1576
        %v1604 = vpack.c.b16 %v1579, %v1578
        %v1605 = vpack.c.b16 %v1581, %v1580
        %v1606 = vpack.c.b16 %v1583, %v1582
        %v1607 = vpack.c.b16 %v1585, %v1584
        %v1608 = vpack.c.b16 %v1587, %v1586
        %v1609 = vpack.c.b16 %v1589, %v1588
        %v1610 = vpack.c.b16 %v1591, %v1590
        %v1611 = vpack.c.b16 %v1593, %v1592
        %v1612 = vpack.c.b16 %v1595, %v1594
        %v1613 = vpack.c.b16 %v1597, %v1596
        %1630 = vmatprep.subr.bf16.mxu0 0
        %1631 = vmatpush1.bf16.msra.mxu0 %v1598
        %1632 = vmatprep.subr.bf16.mxu0 0
        %1633 = vmatpush1.bf16.msra.mxu0 %v1599
        %1634 = vmatprep.subr.bf16.mxu0 0
        %1635 = vmatpush1.bf16.msra.mxu0 %v1600
        %1636 = vmatprep.subr.bf16.mxu0 0
        %1637 = vmatpush1.bf16.msra.mxu0 %v1601
        %1638 = vmatprep.subr.bf16.mxu0 0
        %1639 = vmatpush1.bf16.msra.mxu0 %v1602
        %1640 = vmatprep.subr.bf16.mxu0 0
        %1641 = vmatpush1.bf16.msra.mxu0 %v1603
        %1642 = vmatprep.subr.bf16.mxu0 0
        %1643 = vmatpush1.bf16.msra.mxu0 %v1604
        %1644 = vmatprep.subr.bf16.mxu0 0
        %1645 = vmatpush1.bf16.msra.mxu0 %v1605
        %1646 = vmatprep.subr.bf16.mxu0 0
        %1647 = vmatpush1.bf16.msra.mxu0 %v1606
        %1648 = vmatprep.subr.bf16.mxu0 0
        %1649 = vmatpush1.bf16.msra.mxu0 %v1607
        %1650 = vmatprep.subr.bf16.mxu0 0
        %1651 = vmatpush1.bf16.msra.mxu0 %v1608
        %1652 = vmatprep.subr.bf16.mxu0 0
        %1653 = vmatpush1.bf16.msra.mxu0 %v1609
        %1654 = vmatprep.subr.bf16.mxu0 0
        %1655 = vmatpush1.bf16.msra.mxu0 %v1610
        %1656 = vmatprep.subr.bf16.mxu0 0
        %1657 = vmatpush1.bf16.msra.mxu0 %v1611
        %1658 = vmatprep.subr.bf16.mxu0 0
        %1659 = vmatpush1.bf16.msra.mxu0 %v1612
        %1660 = vmatprep.subr.bf16.mxu0 0
        %1661 = vmatpush1.bf16.msra.mxu0 %v1613
        %1662 = vmatprep.mubr.bf16.mxu0 %v1532
        %1663 = vmatmul.mubr.bf16.gmra.mrb[0].mxu0 %v1531
        %v1664 = vpop.f32.mrb[0].mxu0
        %v1665 = vadd.f32 %v1533, %v1664
        %v1666 = vpop.f32.mrb[0].mxu0
        %v1667 = vpop.f32.mrb[0].mxu0
        %v1668 = vpop.f32.mrb[0].mxu0
        %1669 = vdwg.mxu0
        %1670 = vst [vmem:[%s214] sm:$0xff] %v1665
        %s1671 = sand.u32 %s97, 1
        %s1672 = scalar_lea.sflag [#allocation4], %s1671
        %s1673 = sand.u32 %s97, 1
        %s1674 = smul.addr %s1673, 8
        %s1675 = scalar_lea.vmem [#allocation8], %s1674
        // Predicated region
        $region45: #{tpu_custom_call.1} parent=31 // pred_check
          %p1676 = pneg %p107
        $region46: #{tpu_custom_call.1} parent=31 // pred_check_branch
          %1678 = sbr.rel (%p1676) target = $region48
        $region47: #{tpu_custom_call.1} parent=31 // pred_region
          %s1680 = ssub.s32 128, 128
          %1681 = vsyncadd %s1672, %s1680
          %s1682 = smul.addr %s21, 128
          %s1683 = scalar_lea.hbm %s3, %s1682
          %s1685 = sshll.u32 %s1675, 4
          %s1686 = int_to_ptr.vmem [resolvable:$true] %s1685
          %1688 = dma.vmem_to_hbm [thread:$0]  %s1686, 128, %s1683, %s1672
        $region48: #{tpu_custom_call.1} parent=31 // pred_fallthru
          _
      $region32: #{tpu_custom_call.1} parent=5 // pred_fallthru
        _
      %p1689 = scmp.le.s32.totalorder 2, %s16
      // Predicated region
      $region49: #{tpu_custom_call.1} parent=5 // pred_check
        %p1690 = pneg %p1689
      $region50: #{tpu_custom_call.1} parent=5 // pred_check_branch
        %1692 = sbr.rel (%p1690) target = $region52
      $region51: #{tpu_custom_call.1} parent=5 // pred_region
        %s1693 = ssub.s32 %s16, 2
        // Predicated region
        $region53: #{tpu_custom_call.1} parent=51 // pred_check
          %p1694 = pneg %p113
        $region54: #{tpu_custom_call.1} parent=51 // pred_check_branch
          %1696 = sbr.rel (%p1694) target = $region56
        $region55: #{tpu_custom_call.1} parent=51 // pred_region
          %s1697 = sand.u32 %s98, 1
          %s1698 = scalar_lea.sflag [#allocation4], %s1697
          %s1699 = sand.u32 %s98, 1
          %s1700 = smul.addr %s1699, 8
          %s1701 = scalar_lea.vmem [#allocation8], %s1700
          %1702 = dma.done %s1698, 128
        $region56: #{tpu_custom_call.1} parent=51 // pred_fallthru
          _
      $region52: #{tpu_custom_call.1} parent=5 // pred_fallthru
        _
    $region6: #{tpu_custom_call.1} parent=1 // loop_footer
      %s20 = sadd.s32 1, %s16
    $region7: #{tpu_custom_call.1} parent=1 // loop_footer_branch
      %15 = sbr.rel target = $region3
    $region8: #{tpu_custom_call.1} parent=1 // loop_exit
      _
    %1703 = vsyncpa [#allocation3], 1
    %s1704 = scalar_lea.sflag [#allocation3], 1
    %1705 = vsyncpa %s1704, 1
    %1706 = vsyncpa [#allocation6], 1
    %1707 = vsyncpa [#allocation4], 1
    %s1708 = scalar_lea.sflag [#allocation4], 1
    %1709 = vsyncpa %s1708, 1

</llo_original>
